<compile_context>
chip_gen: v6e
topology: v6e:2x2x1
jax: 0.10.0
libtpu: 0.0.40
codegen_flags: <defaults>
</compile_context>

<pallas_src>
import functools

import jax
import jax.numpy as jnp
from jax import lax
from jax.experimental import pallas as pl
from jax.experimental.pallas import tpu as pltpu

NEWTON_ITERS = 6  # matches TimeFunction.forward(iters=6)


def _newton_t(weights, evals, gamma, batch):
    """Solve sum_i w_i * exp(-t * e_i) == sum(w) - gamma * batch  (TimeFunction)."""
    to_leave = jnp.sum(weights, axis=0, keepdims=True) - gamma * batch          # [1,1]
    # Pack [w, w*e] so every Newton step needs a single cross-sublane reduce.
    we2 = weights * jnp.concatenate([jnp.ones_like(evals), evals], axis=1)       # [B,2]

    def step(_, t):
        ex = jnp.exp(-t * evals)                                                 # [B,1]
        sums = jnp.sum(we2 * ex, axis=0, keepdims=True)                          # [1,2] = [Σv, Σv*e]
        resid = sums[:, 0:1] - to_leave                                          # f(t)
        denom = jnp.maximum(sums[:, 1:2], 1e-20)                                 # -f'(t), clamped
        # t - f/f'  ==  t + f / Σ(v*e); 1/x on the EUP slot (approx is fine for Newton)
        return t + resid * pl.reciprocal(denom, approx=True)

    return lax.fori_loop(0, NEWTON_ITERS, step,
                         jnp.zeros((1, 1), jnp.float32), unroll=True)


def _eet_kernel(x_ref, w_ref, b_ref, logits_ref, consume_ref, evals_ref, *,
                num_heads, num_classes, consume_gammas, update_gammas):
    batch = x_ref.shape[0]

    # ---- all heads' logits in one MXU matmul (bf16 operands, f32 accumulate) ----
    logits_all = jnp.dot(x_ref[...], w_ref[...],
                         preferred_element_type=jnp.float32) + b_ref[...]        # [B, H*C] f32
    logits_ref[...] = logits_all.astype(logits_ref.dtype)

    weights = jnp.ones((batch, 1), jnp.float32)   # remaining weights, carried across heads
    consume_cols = []
    evals_cols = []

    for h in range(num_heads):                    # static unrolled loop, H = 4
        logits_h = logits_all[:, h * num_classes:(h + 1) * num_classes]          # [B, C]

        # ---- confidence eval (module semantics), all f32 (v5e: no bf16 VPU/EUP) ----
        lmax = jnp.max(logits_h, axis=1, keepdims=True)
        expl = jnp.exp(logits_h - lmax)
        probs = expl / jnp.sum(expl, axis=1, keepdims=True)                      # softmax dim=1
        pmax = jnp.max(probs, axis=1, keepdims=True)
        psum = jnp.sum(probs, axis=1, keepdims=True)
        val = -jnp.log(1.0 - pmax - (psum - pmax) / (num_classes - 1) + 1e-5)
        val = jnp.maximum(val, 0.0)                                              # relu
        vmax = jnp.max(val, axis=0, keepdims=True)
        vexp = jnp.exp(val - vmax)
        evals = vexp / jnp.sum(vexp, axis=0, keepdims=True)                      # softmax dim=0, [B,1]
        evals_cols.append(evals)

        if h < num_heads - 1:
            cg = consume_gammas[h]
            ug = update_gammas[h]
            t_c = _newton_t(weights, evals, cg, batch)
            rem_c = weights * jnp.exp(-t_c * evals)
            consume = weights - rem_c
            if ug == cg:                           # spec_factor == 1: single solve suffices
                weights = rem_c
            else:                                  # module uses a second solve for the update
                t_u = _newton_t(weights, evals, ug, batch)
                weights = weights * jnp.exp(-t_u * evals)
        else:
            consume = weights                      # last head (gamma=None): take everything left
        consume_cols.append(consume)

    # ---- lane-dense single stores (one slab per output) ----
    consume_ref[...] = jnp.concatenate(consume_cols, axis=1).astype(consume_ref.dtype)
    evals_ref[...] = jnp.concatenate(evals_cols, axis=1).astype(evals_ref.dtype)


def resnet_heads_forward(x, head_weights, head_biases,
                         gammas=(0.25, 0.25, 0.25, None), spec_factor=1.0):
    """x: [B, C, H, W] NCHW. head_weights: [H, F, C]. Returns (logits, consume, evals)."""
    batch = x.shape[0]
    num_heads, feat, num_classes = head_weights.shape

    # bf16 MXU operands; accumulation and all post-matmul math stay f32.
    x_flat = x.reshape(batch, -1).astype(jnp.bfloat16)                           # [B, F]
    w_all = (jnp.transpose(head_weights, (1, 0, 2))
             .reshape(feat, num_heads * num_classes).astype(jnp.bfloat16))       # [F, H*C]
    b_all = head_biases.reshape(1, num_heads * num_classes).astype(jnp.float32)  # [1, H*C]

    # module glue: spec_gamma = -(1-gamma)*spec_factor + 1 (consume solve),
    #              gamma*spec_factor (weights update solve); equal when spec_factor == 1.
    consume_gammas = tuple(1.0 - (1.0 - g) * spec_factor for g in gammas[:-1])
    update_gammas = tuple(g * spec_factor for g in gammas[:-1])

    kernel = functools.partial(
        _eet_kernel, num_heads=num_heads, num_classes=num_classes,
        consume_gammas=consume_gammas, update_gammas=update_gammas)

    logits_flat, consume_flat, evals_flat = pl.pallas_call(
        kernel,
        out_shape=(
            jax.ShapeDtypeStruct((batch, num_heads * num_classes), jnp.float32),
            jax.ShapeDtypeStruct((batch, num_heads), jnp.float32),
            jax.ShapeDtypeStruct((batch, num_heads), jnp.float32),
        ),
        in_specs=[
            pl.BlockSpec(memory_space=pltpu.MemorySpace.VMEM),   # x_flat (resident)
            pl.BlockSpec(memory_space=pltpu.MemorySpace.VMEM),   # fused W (resident, ~80 KiB)
            pl.BlockSpec(memory_space=pltpu.MemorySpace.VMEM),   # fused bias
        ],
        out_specs=(
            pl.BlockSpec(memory_space=pltpu.MemorySpace.VMEM),
            pl.BlockSpec(memory_space=pltpu.MemorySpace.VMEM),
            pl.BlockSpec(memory_space=pltpu.MemorySpace.VMEM),
        ),
    )(x_flat, w_all, b_all)

    # wrapper-side layout plumbing back to per-head views (module returns lists y, w, evals)
    all_logits = jnp.transpose(
        logits_flat.reshape(batch, num_heads, num_classes), (1, 0, 2))           # [H, B, C]
    all_consume = jnp.transpose(consume_flat)[:, :, None]                        # [H, B, 1]
    all_evals = jnp.transpose(evals_flat)[:, :, None]                            # [H, B, 1]
    return all_logits, all_consume, all_evals


if __name__ == "__main__":
    key = jax.random.PRNGKey(0)
    k_x, k_w, k_b = jax.random.split(key, 3)

    # small shapes consistent with the module's forward (Linear(..., out_features=10), 4 heads)
    BATCH, CH, SP, NUM_CLASSES, NUM_HEADS = 8, 4, 16, 10, 4
    FEAT = CH * SP * SP

    x = jax.random.normal(k_x, (BATCH, CH, SP, SP), dtype=jnp.float32)           # NCHW
    head_w = 0.05 * jax.random.normal(k_w, (NUM_HEADS, FEAT, NUM_CLASSES), jnp.float32)
    head_b = 0.05 * jax.random.normal(k_b, (NUM_HEADS, NUM_CLASSES), jnp.float32)

    logits, consume, evals = resnet_heads_forward(x, head_w, head_b)
    jax.block_until_ready((logits, consume, evals))

    # sanity: each non-last head consumes ~gamma*B of weight mass (Newton constraint),
    # total consumed mass equals the batch size, evals are a batch softmax (sum to 1).
    for h in range(NUM_HEADS - 1):
        assert abs(float(jnp.sum(consume[h])) - 0.25 * BATCH) < 0.1
    assert abs(float(jnp.sum(consume)) - BATCH) < 1e-2
    for h in range(NUM_HEADS):
        assert abs(float(jnp.sum(evals[h])) - 1.0) < 1e-3
    assert logits.shape == (NUM_HEADS, BATCH, NUM_CLASSES)

    print("KERNEL_OK")
</pallas_src>

<mosaic_0001>
module attributes {stable_mosaic.version = 11 : i64} {
  func.func @_eet_kernel(%arg0: memref<8x1024xbf16, #tpu.memory_space<vmem>>, %arg1: memref<1024x40xbf16, #tpu.memory_space<vmem>>, %arg2: memref<1x40xf32, #tpu.memory_space<vmem>>, %arg3: memref<8x40xf32, #tpu.memory_space<vmem>>, %arg4: memref<8x4xf32, #tpu.memory_space<vmem>>, %arg5: memref<8x4xf32, #tpu.memory_space<vmem>>) attributes {dimension_semantics = [], scalar_prefetch = 0 : i64, scratch_operands = 0 : i64, tpu.core_type = #tpu.core_type<tc>} {
    %c0 = arith.constant 0 : index
    %c0_0 = arith.constant 0 : index
    %0 = vector.load %arg0[%c0, %c0_0] : memref<8x1024xbf16, #tpu.memory_space<vmem>>, vector<8x1024xbf16>
    %c0_1 = arith.constant 0 : index
    %c0_2 = arith.constant 0 : index
    %1 = vector.load %arg1[%c0_1, %c0_2] : memref<1024x40xbf16, #tpu.memory_space<vmem>>, vector<1024x40xbf16>
    %cst = arith.constant dense<0.000000e+00> : vector<8x40xf32>
    %2 = tpu.matmul %0, %1, %cst {dimension_numbers = #tpu.dot_dimension_numbers<[1], [0], [0], [1], [0, 0, 1, 1], [], []>} : vector<8x1024xbf16>, vector<1024x40xbf16>, vector<8x40xf32> -> vector<8x40xf32>
    %c0_3 = arith.constant 0 : index
    %c0_4 = arith.constant 0 : index
    %3 = vector.load %arg2[%c0_3, %c0_4] : memref<1x40xf32, #tpu.memory_space<vmem>>, vector<1x40xf32>
    %4 = vector.broadcast %3 : vector<1x40xf32> to vector<8x40xf32>
    %5 = arith.addf %2, %4 : vector<8x40xf32>
    %c0_5 = arith.constant 0 : index
    %c0_6 = arith.constant 0 : index
    %6 = vector.load %arg3[%c0_5, %c0_6] : memref<8x40xf32, #tpu.memory_space<vmem>>, vector<8x40xf32>
    tpu.vector_store %arg3[%c0_5, %c0_6], %5 {strides = array<i32>} : memref<8x40xf32, #tpu.memory_space<vmem>>, vector<8x40xf32>,
    %cst_7 = arith.constant 1.000000e+00 : f32
    %7 = vector.broadcast %cst_7 : f32 to vector<8x1xf32>
    %8 = vector.extract_strided_slice %5 {offsets = [0, 0], sizes = [8, 10], strides = [1, 1]} : vector<8x40xf32> to vector<8x10xf32>
    %cst_8 = arith.constant dense<0xFF800000> : vector<8xf32>
    %9 = vector.multi_reduction <maximumf>, %8, %cst_8 [1] : vector<8x10xf32> to vector<8xf32>
    %10 = vector.shape_cast %9 : vector<8xf32> to vector<8x1xf32>
    %11 = vector.broadcast %10 : vector<8x1xf32> to vector<8x10xf32>
    %12 = arith.subf %8, %11 : vector<8x10xf32>
    %13 = math.exp %12 : vector<8x10xf32>
    %cst_9 = arith.constant dense<0.000000e+00> : vector<8xf32>
    %14 = vector.multi_reduction <add>, %13, %cst_9 [1] : vector<8x10xf32> to vector<8xf32>
    %15 = vector.shape_cast %14 : vector<8xf32> to vector<8x1xf32>
    %16 = vector.broadcast %15 : vector<8x1xf32> to vector<8x10xf32>
    %17 = arith.divf %13, %16 : vector<8x10xf32>
    %cst_10 = arith.constant dense<0xFF800000> : vector<8xf32>
    %18 = vector.multi_reduction <maximumf>, %17, %cst_10 [1] : vector<8x10xf32> to vector<8xf32>
    %19 = vector.shape_cast %18 : vector<8xf32> to vector<8x1xf32>
    %cst_11 = arith.constant dense<0.000000e+00> : vector<8xf32>
    %20 = vector.multi_reduction <add>, %17, %cst_11 [1] : vector<8x10xf32> to vector<8xf32>
    %21 = vector.shape_cast %20 : vector<8xf32> to vector<8x1xf32>
    %cst_12 = arith.constant 1.000000e+00 : f32
    %22 = vector.broadcast %cst_12 : f32 to vector<8x1xf32>
    %23 = arith.subf %22, %19 : vector<8x1xf32>
    %24 = arith.subf %21, %19 : vector<8x1xf32>
    %cst_13 = arith.constant 9.000000e+00 : f32
    %25 = vector.broadcast %cst_13 : f32 to vector<8x1xf32>
    %26 = arith.divf %24, %25 : vector<8x1xf32>
    %27 = arith.subf %23, %26 : vector<8x1xf32>
    %cst_14 = arith.constant 9.99999974E-6 : f32
    %28 = vector.broadcast %cst_14 : f32 to vector<8x1xf32>
    %29 = arith.addf %27, %28 : vector<8x1xf32>
    %30 = math.log %29 : vector<8x1xf32>
    %cst_15 = arith.constant 0.000000e+00 : f32
    %31 = vector.broadcast %cst_15 : f32 to vector<8x1xf32>
    %32 = arith.subf %31, %30 : vector<8x1xf32>
    %cst_16 = arith.constant 0.000000e+00 : f32
    %33 = vector.broadcast %cst_16 : f32 to vector<8x1xf32>
    %34 = arith.maximumf %32, %33 : vector<8x1xf32>
    %cst_17 = arith.constant dense<0xFF800000> : vector<1xf32>
    %35 = vector.multi_reduction <maximumf>, %34, %cst_17 [0] : vector<8x1xf32> to vector<1xf32>
    %36 = vector.shape_cast %35 : vector<1xf32> to vector<1x1xf32>
    %37 = vector.broadcast %36 : vector<1x1xf32> to vector<8x1xf32>
    %38 = arith.subf %34, %37 : vector<8x1xf32>
    %39 = math.exp %38 : vector<8x1xf32>
    %cst_18 = arith.constant dense<0.000000e+00> : vector<1xf32>
    %40 = vector.multi_reduction <add>, %39, %cst_18 [0] : vector<8x1xf32> to vector<1xf32>
    %41 = vector.shape_cast %40 : vector<1xf32> to vector<1x1xf32>
    %42 = vector.broadcast %41 : vector<1x1xf32> to vector<8x1xf32>
    %43 = arith.divf %39, %42 : vector<8x1xf32>
    %cst_19 = arith.constant dense<0.000000e+00> : vector<1xf32>
    %44 = vector.multi_reduction <add>, %7, %cst_19 [0] : vector<8x1xf32> to vector<1xf32>
    %45 = vector.shape_cast %44 : vector<1xf32> to vector<1x1xf32>
    %cst_20 = arith.constant 2.000000e+00 : f32
    %46 = vector.broadcast %cst_20 : f32 to vector<1x1xf32>
    %47 = arith.subf %45, %46 : vector<1x1xf32>
    %cst_21 = arith.constant 1.000000e+00 : f32
    %48 = vector.broadcast %cst_21 : f32 to vector<8x1xf32>
    %49 = tpu.concatenate %48, %43 in 1 : vector<8x1xf32>, vector<8x1xf32> -> vector<8x2xf32>
    %50 = vector.broadcast %7 : vector<8x1xf32> to vector<8x2xf32>
    %51 = arith.mulf %50, %49 : vector<8x2xf32>
    %cst_22 = arith.constant 0.000000e+00 : f32
    %52 = vector.broadcast %cst_22 : f32 to vector<1x1xf32>
    %c0_i32 = arith.constant 0 : i32
    %cst_23 = arith.constant 0.000000e+00 : f32
    %53 = vector.broadcast %cst_23 : f32 to vector<1x1xf32>
    %54 = arith.subf %53, %52 : vector<1x1xf32>
    %55 = vector.broadcast %54 : vector<1x1xf32> to vector<8x1xf32>
    %56 = arith.mulf %55, %43 : vector<8x1xf32>
    %57 = math.exp %56 : vector<8x1xf32>
    %58 = vector.broadcast %57 : vector<8x1xf32> to vector<8x2xf32>
    %59 = arith.mulf %51, %58 : vector<8x2xf32>
    %cst_24 = arith.constant dense<0.000000e+00> : vector<2xf32>
    %60 = vector.multi_reduction <add>, %59, %cst_24 [0] : vector<8x2xf32> to vector<2xf32>
    %61 = vector.shape_cast %60 : vector<2xf32> to vector<1x2xf32>
    %62 = vector.extract_strided_slice %61 {offsets = [0, 0], sizes = [1, 1], strides = [1, 1]} : vector<1x2xf32> to vector<1x1xf32>
    %63 = arith.subf %62, %47 : vector<1x1xf32>
    %64 = vector.extract_strided_slice %61 {offsets = [0, 1], sizes = [1, 1], strides = [1, 1]} : vector<1x2xf32> to vector<1x1xf32>
    %cst_25 = arith.constant 9.99999968E-21 : f32
    %65 = vector.broadcast %cst_25 : f32 to vector<1x1xf32>
    %66 = arith.maximumf %64, %65 : vector<1x1xf32>
    %67 = tpu.reciprocal %66 {approx = true} : vector<1x1xf32> -> vector<1x1xf32>
    %68 = arith.mulf %63, %67 : vector<1x1xf32>
    %69 = arith.addf %52, %68 : vector<1x1xf32>
    %c1_i32 = arith.constant 1 : i32
    %cst_26 = arith.constant 0.000000e+00 : f32
    %70 = vector.broadcast %cst_26 : f32 to vector<1x1xf32>
    %71 = arith.subf %70, %69 : vector<1x1xf32>
    %72 = vector.broadcast %71 : vector<1x1xf32> to vector<8x1xf32>
    %73 = arith.mulf %72, %43 : vector<8x1xf32>
    %74 = math.exp %73 : vector<8x1xf32>
    %75 = vector.broadcast %74 : vector<8x1xf32> to vector<8x2xf32>
    %76 = arith.mulf %51, %75 : vector<8x2xf32>
    %cst_27 = arith.constant dense<0.000000e+00> : vector<2xf32>
    %77 = vector.multi_reduction <add>, %76, %cst_27 [0] : vector<8x2xf32> to vector<2xf32>
    %78 = vector.shape_cast %77 : vector<2xf32> to vector<1x2xf32>
    %79 = vector.extract_strided_slice %78 {offsets = [0, 0], sizes = [1, 1], strides = [1, 1]} : vector<1x2xf32> to vector<1x1xf32>
    %80 = arith.subf %79, %47 : vector<1x1xf32>
    %81 = vector.extract_strided_slice %78 {offsets = [0, 1], sizes = [1, 1], strides = [1, 1]} : vector<1x2xf32> to vector<1x1xf32>
    %cst_28 = arith.constant 9.99999968E-21 : f32
    %82 = vector.broadcast %cst_28 : f32 to vector<1x1xf32>
    %83 = arith.maximumf %81, %82 : vector<1x1xf32>
    %84 = tpu.reciprocal %83 {approx = true} : vector<1x1xf32> -> vector<1x1xf32>
    %85 = arith.mulf %80, %84 : vector<1x1xf32>
    %86 = arith.addf %69, %85 : vector<1x1xf32>
    %c2_i32 = arith.constant 2 : i32
    %cst_29 = arith.constant 0.000000e+00 : f32
    %87 = vector.broadcast %cst_29 : f32 to vector<1x1xf32>
    %88 = arith.subf %87, %86 : vector<1x1xf32>
    %89 = vector.broadcast %88 : vector<1x1xf32> to vector<8x1xf32>
    %90 = arith.mulf %89, %43 : vector<8x1xf32>
    %91 = math.exp %90 : vector<8x1xf32>
    %92 = vector.broadcast %91 : vector<8x1xf32> to vector<8x2xf32>
    %93 = arith.mulf %51, %92 : vector<8x2xf32>
    %cst_30 = arith.constant dense<0.000000e+00> : vector<2xf32>
    %94 = vector.multi_reduction <add>, %93, %cst_30 [0] : vector<8x2xf32> to vector<2xf32>
    %95 = vector.shape_cast %94 : vector<2xf32> to vector<1x2xf32>
    %96 = vector.extract_strided_slice %95 {offsets = [0, 0], sizes = [1, 1], strides = [1, 1]} : vector<1x2xf32> to vector<1x1xf32>
    %97 = arith.subf %96, %47 : vector<1x1xf32>
    %98 = vector.extract_strided_slice %95 {offsets = [0, 1], sizes = [1, 1], strides = [1, 1]} : vector<1x2xf32> to vector<1x1xf32>
    %cst_31 = arith.constant 9.99999968E-21 : f32
    %99 = vector.broadcast %cst_31 : f32 to vector<1x1xf32>
    %100 = arith.maximumf %98, %99 : vector<1x1xf32>
    %101 = tpu.reciprocal %100 {approx = true} : vector<1x1xf32> -> vector<1x1xf32>
    %102 = arith.mulf %97, %101 : vector<1x1xf32>
    %103 = arith.addf %86, %102 : vector<1x1xf32>
    %c3_i32 = arith.constant 3 : i32
    %cst_32 = arith.constant 0.000000e+00 : f32
    %104 = vector.broadcast %cst_32 : f32 to vector<1x1xf32>
    %105 = arith.subf %104, %103 : vector<1x1xf32>
    %106 = vector.broadcast %105 : vector<1x1xf32> to vector<8x1xf32>
    %107 = arith.mulf %106, %43 : vector<8x1xf32>
    %108 = math.exp %107 : vector<8x1xf32>
    %109 = vector.broadcast %108 : vector<8x1xf32> to vector<8x2xf32>
    %110 = arith.mulf %51, %109 : vector<8x2xf32>
    %cst_33 = arith.constant dense<0.000000e+00> : vector<2xf32>
    %111 = vector.multi_reduction <add>, %110, %cst_33 [0] : vector<8x2xf32> to vector<2xf32>
    %112 = vector.shape_cast %111 : vector<2xf32> to vector<1x2xf32>
    %113 = vector.extract_strided_slice %112 {offsets = [0, 0], sizes = [1, 1], strides = [1, 1]} : vector<1x2xf32> to vector<1x1xf32>
    %114 = arith.subf %113, %47 : vector<1x1xf32>
    %115 = vector.extract_strided_slice %112 {offsets = [0, 1], sizes = [1, 1], strides = [1, 1]} : vector<1x2xf32> to vector<1x1xf32>
    %cst_34 = arith.constant 9.99999968E-21 : f32
    %116 = vector.broadcast %cst_34 : f32 to vector<1x1xf32>
    %117 = arith.maximumf %115, %116 : vector<1x1xf32>
    %118 = tpu.reciprocal %117 {approx = true} : vector<1x1xf32> -> vector<1x1xf32>
    %119 = arith.mulf %114, %118 : vector<1x1xf32>
    %120 = arith.addf %103, %119 : vector<1x1xf32>
    %c4_i32 = arith.constant 4 : i32
    %cst_35 = arith.constant 0.000000e+00 : f32
    %121 = vector.broadcast %cst_35 : f32 to vector<1x1xf32>
    %122 = arith.subf %121, %120 : vector<1x1xf32>
    %123 = vector.broadcast %122 : vector<1x1xf32> to vector<8x1xf32>
    %124 = arith.mulf %123, %43 : vector<8x1xf32>
    %125 = math.exp %124 : vector<8x1xf32>
    %126 = vector.broadcast %125 : vector<8x1xf32> to vector<8x2xf32>
    %127 = arith.mulf %51, %126 : vector<8x2xf32>
    %cst_36 = arith.constant dense<0.000000e+00> : vector<2xf32>
    %128 = vector.multi_reduction <add>, %127, %cst_36 [0] : vector<8x2xf32> to vector<2xf32>
    %129 = vector.shape_cast %128 : vector<2xf32> to vector<1x2xf32>
    %130 = vector.extract_strided_slice %129 {offsets = [0, 0], sizes = [1, 1], strides = [1, 1]} : vector<1x2xf32> to vector<1x1xf32>
    %131 = arith.subf %130, %47 : vector<1x1xf32>
    %132 = vector.extract_strided_slice %129 {offsets = [0, 1], sizes = [1, 1], strides = [1, 1]} : vector<1x2xf32> to vector<1x1xf32>
    %cst_37 = arith.constant 9.99999968E-21 : f32
    %133 = vector.broadcast %cst_37 : f32 to vector<1x1xf32>
    %134 = arith.maximumf %132, %133 : vector<1x1xf32>
    %135 = tpu.reciprocal %134 {approx = true} : vector<1x1xf32> -> vector<1x1xf32>
    %136 = arith.mulf %131, %135 : vector<1x1xf32>
    %137 = arith.addf %120, %136 : vector<1x1xf32>
    %c5_i32 = arith.constant 5 : i32
    %cst_38 = arith.constant 0.000000e+00 : f32
    %138 = vector.broadcast %cst_38 : f32 to vector<1x1xf32>
    %139 = arith.subf %138, %137 : vector<1x1xf32>
    %140 = vector.broadcast %139 : vector<1x1xf32> to vector<8x1xf32>
    %141 = arith.mulf %140, %43 : vector<8x1xf32>
    %142 = math.exp %141 : vector<8x1xf32>
    %143 = vector.broadcast %142 : vector<8x1xf32> to vector<8x2xf32>
    %144 = arith.mulf %51, %143 : vector<8x2xf32>
    %cst_39 = arith.constant dense<0.000000e+00> : vector<2xf32>
    %145 = vector.multi_reduction <add>, %144, %cst_39 [0] : vector<8x2xf32> to vector<2xf32>
    %146 = vector.shape_cast %145 : vector<2xf32> to vector<1x2xf32>
    %147 = vector.extract_strided_slice %146 {offsets = [0, 0], sizes = [1, 1], strides = [1, 1]} : vector<1x2xf32> to vector<1x1xf32>
    %148 = arith.subf %147, %47 : vector<1x1xf32>
    %149 = vector.extract_strided_slice %146 {offsets = [0, 1], sizes = [1, 1], strides = [1, 1]} : vector<1x2xf32> to vector<1x1xf32>
    %cst_40 = arith.constant 9.99999968E-21 : f32
    %150 = vector.broadcast %cst_40 : f32 to vector<1x1xf32>
    %151 = arith.maximumf %149, %150 : vector<1x1xf32>
    %152 = tpu.reciprocal %151 {approx = true} : vector<1x1xf32> -> vector<1x1xf32>
    %153 = arith.mulf %148, %152 : vector<1x1xf32>
    %154 = arith.addf %137, %153 : vector<1x1xf32>
    %cst_41 = arith.constant 0.000000e+00 : f32
    %155 = vector.broadcast %cst_41 : f32 to vector<1x1xf32>
    %156 = arith.subf %155, %154 : vector<1x1xf32>
    %157 = vector.broadcast %156 : vector<1x1xf32> to vector<8x1xf32>
    %158 = arith.mulf %157, %43 : vector<8x1xf32>
    %159 = math.exp %158 : vector<8x1xf32>
    %160 = arith.mulf %7, %159 : vector<8x1xf32>
    %161 = arith.subf %7, %160 : vector<8x1xf32>
    %162 = vector.extract_strided_slice %5 {offsets = [0, 10], sizes = [8, 10], strides = [1, 1]} : vector<8x40xf32> to vector<8x10xf32>
    %cst_42 = arith.constant dense<0xFF800000> : vector<8xf32>
    %163 = vector.multi_reduction <maximumf>, %162, %cst_42 [1] : vector<8x10xf32> to vector<8xf32>
    %164 = vector.shape_cast %163 : vector<8xf32> to vector<8x1xf32>
    %165 = vector.broadcast %164 : vector<8x1xf32> to vector<8x10xf32>
    %166 = arith.subf %162, %165 : vector<8x10xf32>
    %167 = math.exp %166 : vector<8x10xf32>
    %cst_43 = arith.constant dense<0.000000e+00> : vector<8xf32>
    %168 = vector.multi_reduction <add>, %167, %cst_43 [1] : vector<8x10xf32> to vector<8xf32>
    %169 = vector.shape_cast %168 : vector<8xf32> to vector<8x1xf32>
    %170 = vector.broadcast %169 : vector<8x1xf32> to vector<8x10xf32>
    %171 = arith.divf %167, %170 : vector<8x10xf32>
    %cst_44 = arith.constant dense<0xFF800000> : vector<8xf32>
    %172 = vector.multi_reduction <maximumf>, %171, %cst_44 [1] : vector<8x10xf32> to vector<8xf32>
    %173 = vector.shape_cast %172 : vector<8xf32> to vector<8x1xf32>
    %cst_45 = arith.constant dense<0.000000e+00> : vector<8xf32>
    %174 = vector.multi_reduction <add>, %171, %cst_45 [1] : vector<8x10xf32> to vector<8xf32>
    %175 = vector.shape_cast %174 : vector<8xf32> to vector<8x1xf32>
    %cst_46 = arith.constant 1.000000e+00 : f32
    %176 = vector.broadcast %cst_46 : f32 to vector<8x1xf32>
    %177 = arith.subf %176, %173 : vector<8x1xf32>
    %178 = arith.subf %175, %173 : vector<8x1xf32>
    %cst_47 = arith.constant 9.000000e+00 : f32
    %179 = vector.broadcast %cst_47 : f32 to vector<8x1xf32>
    %180 = arith.divf %178, %179 : vector<8x1xf32>
    %181 = arith.subf %177, %180 : vector<8x1xf32>
    %cst_48 = arith.constant 9.99999974E-6 : f32
    %182 = vector.broadcast %cst_48 : f32 to vector<8x1xf32>
    %183 = arith.addf %181, %182 : vector<8x1xf32>
    %184 = math.log %183 : vector<8x1xf32>
    %cst_49 = arith.constant 0.000000e+00 : f32
    %185 = vector.broadcast %cst_49 : f32 to vector<8x1xf32>
    %186 = arith.subf %185, %184 : vector<8x1xf32>
    %cst_50 = arith.constant 0.000000e+00 : f32
    %187 = vector.broadcast %cst_50 : f32 to vector<8x1xf32>
    %188 = arith.maximumf %186, %187 : vector<8x1xf32>
    %cst_51 = arith.constant dense<0xFF800000> : vector<1xf32>
    %189 = vector.multi_reduction <maximumf>, %188, %cst_51 [0] : vector<8x1xf32> to vector<1xf32>
    %190 = vector.shape_cast %189 : vector<1xf32> to vector<1x1xf32>
    %191 = vector.broadcast %190 : vector<1x1xf32> to vector<8x1xf32>
    %192 = arith.subf %188, %191 : vector<8x1xf32>
    %193 = math.exp %192 : vector<8x1xf32>
    %cst_52 = arith.constant dense<0.000000e+00> : vector<1xf32>
    %194 = vector.multi_reduction <add>, %193, %cst_52 [0] : vector<8x1xf32> to vector<1xf32>
    %195 = vector.shape_cast %194 : vector<1xf32> to vector<1x1xf32>
    %196 = vector.broadcast %195 : vector<1x1xf32> to vector<8x1xf32>
    %197 = arith.divf %193, %196 : vector<8x1xf32>
    %cst_53 = arith.constant dense<0.000000e+00> : vector<1xf32>
    %198 = vector.multi_reduction <add>, %160, %cst_53 [0] : vector<8x1xf32> to vector<1xf32>
    %199 = vector.shape_cast %198 : vector<1xf32> to vector<1x1xf32>
    %cst_54 = arith.constant 2.000000e+00 : f32
    %200 = vector.broadcast %cst_54 : f32 to vector<1x1xf32>
    %201 = arith.subf %199, %200 : vector<1x1xf32>
    %cst_55 = arith.constant 1.000000e+00 : f32
    %202 = vector.broadcast %cst_55 : f32 to vector<8x1xf32>
    %203 = tpu.concatenate %202, %197 in 1 : vector<8x1xf32>, vector<8x1xf32> -> vector<8x2xf32>
    %204 = vector.broadcast %160 : vector<8x1xf32> to vector<8x2xf32>
    %205 = arith.mulf %204, %203 : vector<8x2xf32>
    %cst_56 = arith.constant 0.000000e+00 : f32
    %206 = vector.broadcast %cst_56 : f32 to vector<1x1xf32>
    %c0_i32_57 = arith.constant 0 : i32
    %cst_58 = arith.constant 0.000000e+00 : f32
    %207 = vector.broadcast %cst_58 : f32 to vector<1x1xf32>
    %208 = arith.subf %207, %206 : vector<1x1xf32>
    %209 = vector.broadcast %208 : vector<1x1xf32> to vector<8x1xf32>
    %210 = arith.mulf %209, %197 : vector<8x1xf32>
    %211 = math.exp %210 : vector<8x1xf32>
    %212 = vector.broadcast %211 : vector<8x1xf32> to vector<8x2xf32>
    %213 = arith.mulf %205, %212 : vector<8x2xf32>
    %cst_59 = arith.constant dense<0.000000e+00> : vector<2xf32>
    %214 = vector.multi_reduction <add>, %213, %cst_59 [0] : vector<8x2xf32> to vector<2xf32>
    %215 = vector.shape_cast %214 : vector<2xf32> to vector<1x2xf32>
    %216 = vector.extract_strided_slice %215 {offsets = [0, 0], sizes = [1, 1], strides = [1, 1]} : vector<1x2xf32> to vector<1x1xf32>
    %217 = arith.subf %216, %201 : vector<1x1xf32>
    %218 = vector.extract_strided_slice %215 {offsets = [0, 1], sizes = [1, 1], strides = [1, 1]} : vector<1x2xf32> to vector<1x1xf32>
    %cst_60 = arith.constant 9.99999968E-21 : f32
    %219 = vector.broadcast %cst_60 : f32 to vector<1x1xf32>
    %220 = arith.maximumf %218, %219 : vector<1x1xf32>
    %221 = tpu.reciprocal %220 {approx = true} : vector<1x1xf32> -> vector<1x1xf32>
    %222 = arith.mulf %217, %221 : vector<1x1xf32>
    %223 = arith.addf %206, %222 : vector<1x1xf32>
    %c1_i32_61 = arith.constant 1 : i32
    %cst_62 = arith.constant 0.000000e+00 : f32
    %224 = vector.broadcast %cst_62 : f32 to vector<1x1xf32>
    %225 = arith.subf %224, %223 : vector<1x1xf32>
    %226 = vector.broadcast %225 : vector<1x1xf32> to vector<8x1xf32>
    %227 = arith.mulf %226, %197 : vector<8x1xf32>
    %228 = math.exp %227 : vector<8x1xf32>
    %229 = vector.broadcast %228 : vector<8x1xf32> to vector<8x2xf32>
    %230 = arith.mulf %205, %229 : vector<8x2xf32>
    %cst_63 = arith.constant dense<0.000000e+00> : vector<2xf32>
    %231 = vector.multi_reduction <add>, %230, %cst_63 [0] : vector<8x2xf32> to vector<2xf32>
    %232 = vector.shape_cast %231 : vector<2xf32> to vector<1x2xf32>
    %233 = vector.extract_strided_slice %232 {offsets = [0, 0], sizes = [1, 1], strides = [1, 1]} : vector<1x2xf32> to vector<1x1xf32>
    %234 = arith.subf %233, %201 : vector<1x1xf32>
    %235 = vector.extract_strided_slice %232 {offsets = [0, 1], sizes = [1, 1], strides = [1, 1]} : vector<1x2xf32> to vector<1x1xf32>
    %cst_64 = arith.constant 9.99999968E-21 : f32
    %236 = vector.broadcast %cst_64 : f32 to vector<1x1xf32>
    %237 = arith.maximumf %235, %236 : vector<1x1xf32>
    %238 = tpu.reciprocal %237 {approx = true} : vector<1x1xf32> -> vector<1x1xf32>
    %239 = arith.mulf %234, %238 : vector<1x1xf32>
    %240 = arith.addf %223, %239 : vector<1x1xf32>
    %c2_i32_65 = arith.constant 2 : i32
    %cst_66 = arith.constant 0.000000e+00 : f32
    %241 = vector.broadcast %cst_66 : f32 to vector<1x1xf32>
    %242 = arith.subf %241, %240 : vector<1x1xf32>
    %243 = vector.broadcast %242 : vector<1x1xf32> to vector<8x1xf32>
    %244 = arith.mulf %243, %197 : vector<8x1xf32>
    %245 = math.exp %244 : vector<8x1xf32>
    %246 = vector.broadcast %245 : vector<8x1xf32> to vector<8x2xf32>
    %247 = arith.mulf %205, %246 : vector<8x2xf32>
    %cst_67 = arith.constant dense<0.000000e+00> : vector<2xf32>
    %248 = vector.multi_reduction <add>, %247, %cst_67 [0] : vector<8x2xf32> to vector<2xf32>
    %249 = vector.shape_cast %248 : vector<2xf32> to vector<1x2xf32>
    %250 = vector.extract_strided_slice %249 {offsets = [0, 0], sizes = [1, 1], strides = [1, 1]} : vector<1x2xf32> to vector<1x1xf32>
    %251 = arith.subf %250, %201 : vector<1x1xf32>
    %252 = vector.extract_strided_slice %249 {offsets = [0, 1], sizes = [1, 1], strides = [1, 1]} : vector<1x2xf32> to vector<1x1xf32>
    %cst_68 = arith.constant 9.99999968E-21 : f32
    %253 = vector.broadcast %cst_68 : f32 to vector<1x1xf32>
    %254 = arith.maximumf %252, %253 : vector<1x1xf32>
    %255 = tpu.reciprocal %254 {approx = true} : vector<1x1xf32> -> vector<1x1xf32>
    %256 = arith.mulf %251, %255 : vector<1x1xf32>
    %257 = arith.addf %240, %256 : vector<1x1xf32>
    %c3_i32_69 = arith.constant 3 : i32
    %cst_70 = arith.constant 0.000000e+00 : f32
    %258 = vector.broadcast %cst_70 : f32 to vector<1x1xf32>
    %259 = arith.subf %258, %257 : vector<1x1xf32>
    %260 = vector.broadcast %259 : vector<1x1xf32> to vector<8x1xf32>
    %261 = arith.mulf %260, %197 : vector<8x1xf32>
    %262 = math.exp %261 : vector<8x1xf32>
    %263 = vector.broadcast %262 : vector<8x1xf32> to vector<8x2xf32>
    %264 = arith.mulf %205, %263 : vector<8x2xf32>
    %cst_71 = arith.constant dense<0.000000e+00> : vector<2xf32>
    %265 = vector.multi_reduction <add>, %264, %cst_71 [0] : vector<8x2xf32> to vector<2xf32>
    %266 = vector.shape_cast %265 : vector<2xf32> to vector<1x2xf32>
    %267 = vector.extract_strided_slice %266 {offsets = [0, 0], sizes = [1, 1], strides = [1, 1]} : vector<1x2xf32> to vector<1x1xf32>
    %268 = arith.subf %267, %201 : vector<1x1xf32>
    %269 = vector.extract_strided_slice %266 {offsets = [0, 1], sizes = [1, 1], strides = [1, 1]} : vector<1x2xf32> to vector<1x1xf32>
    %cst_72 = arith.constant 9.99999968E-21 : f32
    %270 = vector.broadcast %cst_72 : f32 to vector<1x1xf32>
    %271 = arith.maximumf %269, %270 : vector<1x1xf32>
    %272 = tpu.reciprocal %271 {approx = true} : vector<1x1xf32> -> vector<1x1xf32>
    %273 = arith.mulf %268, %272 : vector<1x1xf32>
    %274 = arith.addf %257, %273 : vector<1x1xf32>
    %c4_i32_73 = arith.constant 4 : i32
    %cst_74 = arith.constant 0.000000e+00 : f32
    %275 = vector.broadcast %cst_74 : f32 to vector<1x1xf32>
    %276 = arith.subf %275, %274 : vector<1x1xf32>
    %277 = vector.broadcast %276 : vector<1x1xf32> to vector<8x1xf32>
    %278 = arith.mulf %277, %197 : vector<8x1xf32>
    %279 = math.exp %278 : vector<8x1xf32>
    %280 = vector.broadcast %279 : vector<8x1xf32> to vector<8x2xf32>
    %281 = arith.mulf %205, %280 : vector<8x2xf32>
    %cst_75 = arith.constant dense<0.000000e+00> : vector<2xf32>
    %282 = vector.multi_reduction <add>, %281, %cst_75 [0] : vector<8x2xf32> to vector<2xf32>
    %283 = vector.shape_cast %282 : vector<2xf32> to vector<1x2xf32>
    %284 = vector.extract_strided_slice %283 {offsets = [0, 0], sizes = [1, 1], strides = [1, 1]} : vector<1x2xf32> to vector<1x1xf32>
    %285 = arith.subf %284, %201 : vector<1x1xf32>
    %286 = vector.extract_strided_slice %283 {offsets = [0, 1], sizes = [1, 1], strides = [1, 1]} : vector<1x2xf32> to vector<1x1xf32>
    %cst_76 = arith.constant 9.99999968E-21 : f32
    %287 = vector.broadcast %cst_76 : f32 to vector<1x1xf32>
    %288 = arith.maximumf %286, %287 : vector<1x1xf32>
    %289 = tpu.reciprocal %288 {approx = true} : vector<1x1xf32> -> vector<1x1xf32>
    %290 = arith.mulf %285, %289 : vector<1x1xf32>
    %291 = arith.addf %274, %290 : vector<1x1xf32>
    %c5_i32_77 = arith.constant 5 : i32
    %cst_78 = arith.constant 0.000000e+00 : f32
    %292 = vector.broadcast %cst_78 : f32 to vector<1x1xf32>
    %293 = arith.subf %292, %291 : vector<1x1xf32>
    %294 = vector.broadcast %293 : vector<1x1xf32> to vector<8x1xf32>
    %295 = arith.mulf %294, %197 : vector<8x1xf32>
    %296 = math.exp %295 : vector<8x1xf32>
    %297 = vector.broadcast %296 : vector<8x1xf32> to vector<8x2xf32>
    %298 = arith.mulf %205, %297 : vector<8x2xf32>
    %cst_79 = arith.constant dense<0.000000e+00> : vector<2xf32>
    %299 = vector.multi_reduction <add>, %298, %cst_79 [0] : vector<8x2xf32> to vector<2xf32>
    %300 = vector.shape_cast %299 : vector<2xf32> to vector<1x2xf32>
    %301 = vector.extract_strided_slice %300 {offsets = [0, 0], sizes = [1, 1], strides = [1, 1]} : vector<1x2xf32> to vector<1x1xf32>
    %302 = arith.subf %301, %201 : vector<1x1xf32>
    %303 = vector.extract_strided_slice %300 {offsets = [0, 1], sizes = [1, 1], strides = [1, 1]} : vector<1x2xf32> to vector<1x1xf32>
    %cst_80 = arith.constant 9.99999968E-21 : f32
    %304 = vector.broadcast %cst_80 : f32 to vector<1x1xf32>
    %305 = arith.maximumf %303, %304 : vector<1x1xf32>
    %306 = tpu.reciprocal %305 {approx = true} : vector<1x1xf32> -> vector<1x1xf32>
    %307 = arith.mulf %302, %306 : vector<1x1xf32>
    %308 = arith.addf %291, %307 : vector<1x1xf32>
    %cst_81 = arith.constant 0.000000e+00 : f32
    %309 = vector.broadcast %cst_81 : f32 to vector<1x1xf32>
    %310 = arith.subf %309, %308 : vector<1x1xf32>
    %311 = vector.broadcast %310 : vector<1x1xf32> to vector<8x1xf32>
    %312 = arith.mulf %311, %197 : vector<8x1xf32>
    %313 = math.exp %312 : vector<8x1xf32>
    %314 = arith.mulf %160, %313 : vector<8x1xf32>
    %315 = arith.subf %160, %314 : vector<8x1xf32>
    %316 = vector.extract_strided_slice %5 {offsets = [0, 20], sizes = [8, 10], strides = [1, 1]} : vector<8x40xf32> to vector<8x10xf32>
    %cst_82 = arith.constant dense<0xFF800000> : vector<8xf32>
    %317 = vector.multi_reduction <maximumf>, %316, %cst_82 [1] : vector<8x10xf32> to vector<8xf32>
    %318 = vector.shape_cast %317 : vector<8xf32> to vector<8x1xf32>
    %319 = vector.broadcast %318 : vector<8x1xf32> to vector<8x10xf32>
    %320 = arith.subf %316, %319 : vector<8x10xf32>
    %321 = math.exp %320 : vector<8x10xf32>
    %cst_83 = arith.constant dense<0.000000e+00> : vector<8xf32>
    %322 = vector.multi_reduction <add>, %321, %cst_83 [1] : vector<8x10xf32> to vector<8xf32>
    %323 = vector.shape_cast %322 : vector<8xf32> to vector<8x1xf32>
    %324 = vector.broadcast %323 : vector<8x1xf32> to vector<8x10xf32>
    %325 = arith.divf %321, %324 : vector<8x10xf32>
    %cst_84 = arith.constant dense<0xFF800000> : vector<8xf32>
    %326 = vector.multi_reduction <maximumf>, %325, %cst_84 [1] : vector<8x10xf32> to vector<8xf32>
    %327 = vector.shape_cast %326 : vector<8xf32> to vector<8x1xf32>
    %cst_85 = arith.constant dense<0.000000e+00> : vector<8xf32>
    %328 = vector.multi_reduction <add>, %325, %cst_85 [1] : vector<8x10xf32> to vector<8xf32>
    %329 = vector.shape_cast %328 : vector<8xf32> to vector<8x1xf32>
    %cst_86 = arith.constant 1.000000e+00 : f32
    %330 = vector.broadcast %cst_86 : f32 to vector<8x1xf32>
    %331 = arith.subf %330, %327 : vector<8x1xf32>
    %332 = arith.subf %329, %327 : vector<8x1xf32>
    %cst_87 = arith.constant 9.000000e+00 : f32
    %333 = vector.broadcast %cst_87 : f32 to vector<8x1xf32>
    %334 = arith.divf %332, %333 : vector<8x1xf32>
    %335 = arith.subf %331, %334 : vector<8x1xf32>
    %cst_88 = arith.constant 9.99999974E-6 : f32
    %336 = vector.broadcast %cst_88 : f32 to vector<8x1xf32>
    %337 = arith.addf %335, %336 : vector<8x1xf32>
    %338 = math.log %337 : vector<8x1xf32>
    %cst_89 = arith.constant 0.000000e+00 : f32
    %339 = vector.broadcast %cst_89 : f32 to vector<8x1xf32>
    %340 = arith.subf %339, %338 : vector<8x1xf32>
    %cst_90 = arith.constant 0.000000e+00 : f32
    %341 = vector.broadcast %cst_90 : f32 to vector<8x1xf32>
    %342 = arith.maximumf %340, %341 : vector<8x1xf32>
    %cst_91 = arith.constant dense<0xFF800000> : vector<1xf32>
    %343 = vector.multi_reduction <maximumf>, %342, %cst_91 [0] : vector<8x1xf32> to vector<1xf32>
    %344 = vector.shape_cast %343 : vector<1xf32> to vector<1x1xf32>
    %345 = vector.broadcast %344 : vector<1x1xf32> to vector<8x1xf32>
    %346 = arith.subf %342, %345 : vector<8x1xf32>
    %347 = math.exp %346 : vector<8x1xf32>
    %cst_92 = arith.constant dense<0.000000e+00> : vector<1xf32>
    %348 = vector.multi_reduction <add>, %347, %cst_92 [0] : vector<8x1xf32> to vector<1xf32>
    %349 = vector.shape_cast %348 : vector<1xf32> to vector<1x1xf32>
    %350 = vector.broadcast %349 : vector<1x1xf32> to vector<8x1xf32>
    %351 = arith.divf %347, %350 : vector<8x1xf32>
    %cst_93 = arith.constant dense<0.000000e+00> : vector<1xf32>
    %352 = vector.multi_reduction <add>, %314, %cst_93 [0] : vector<8x1xf32> to vector<1xf32>
    %353 = vector.shape_cast %352 : vector<1xf32> to vector<1x1xf32>
    %cst_94 = arith.constant 2.000000e+00 : f32
    %354 = vector.broadcast %cst_94 : f32 to vector<1x1xf32>
    %355 = arith.subf %353, %354 : vector<1x1xf32>
    %cst_95 = arith.constant 1.000000e+00 : f32
    %356 = vector.broadcast %cst_95 : f32 to vector<8x1xf32>
    %357 = tpu.concatenate %356, %351 in 1 : vector<8x1xf32>, vector<8x1xf32> -> vector<8x2xf32>
    %358 = vector.broadcast %314 : vector<8x1xf32> to vector<8x2xf32>
    %359 = arith.mulf %358, %357 : vector<8x2xf32>
    %cst_96 = arith.constant 0.000000e+00 : f32
    %360 = vector.broadcast %cst_96 : f32 to vector<1x1xf32>
    %c0_i32_97 = arith.constant 0 : i32
    %cst_98 = arith.constant 0.000000e+00 : f32
    %361 = vector.broadcast %cst_98 : f32 to vector<1x1xf32>
    %362 = arith.subf %361, %360 : vector<1x1xf32>
    %363 = vector.broadcast %362 : vector<1x1xf32> to vector<8x1xf32>
    %364 = arith.mulf %363, %351 : vector<8x1xf32>
    %365 = math.exp %364 : vector<8x1xf32>
    %366 = vector.broadcast %365 : vector<8x1xf32> to vector<8x2xf32>
    %367 = arith.mulf %359, %366 : vector<8x2xf32>
    %cst_99 = arith.constant dense<0.000000e+00> : vector<2xf32>
    %368 = vector.multi_reduction <add>, %367, %cst_99 [0] : vector<8x2xf32> to vector<2xf32>
    %369 = vector.shape_cast %368 : vector<2xf32> to vector<1x2xf32>
    %370 = vector.extract_strided_slice %369 {offsets = [0, 0], sizes = [1, 1], strides = [1, 1]} : vector<1x2xf32> to vector<1x1xf32>
    %371 = arith.subf %370, %355 : vector<1x1xf32>
    %372 = vector.extract_strided_slice %369 {offsets = [0, 1], sizes = [1, 1], strides = [1, 1]} : vector<1x2xf32> to vector<1x1xf32>
    %cst_100 = arith.constant 9.99999968E-21 : f32
    %373 = vector.broadcast %cst_100 : f32 to vector<1x1xf32>
    %374 = arith.maximumf %372, %373 : vector<1x1xf32>
    %375 = tpu.reciprocal %374 {approx = true} : vector<1x1xf32> -> vector<1x1xf32>
    %376 = arith.mulf %371, %375 : vector<1x1xf32>
    %377 = arith.addf %360, %376 : vector<1x1xf32>
    %c1_i32_101 = arith.constant 1 : i32
    %cst_102 = arith.constant 0.000000e+00 : f32
    %378 = vector.broadcast %cst_102 : f32 to vector<1x1xf32>
    %379 = arith.subf %378, %377 : vector<1x1xf32>
    %380 = vector.broadcast %379 : vector<1x1xf32> to vector<8x1xf32>
    %381 = arith.mulf %380, %351 : vector<8x1xf32>
    %382 = math.exp %381 : vector<8x1xf32>
    %383 = vector.broadcast %382 : vector<8x1xf32> to vector<8x2xf32>
    %384 = arith.mulf %359, %383 : vector<8x2xf32>
    %cst_103 = arith.constant dense<0.000000e+00> : vector<2xf32>
    %385 = vector.multi_reduction <add>, %384, %cst_103 [0] : vector<8x2xf32> to vector<2xf32>
    %386 = vector.shape_cast %385 : vector<2xf32> to vector<1x2xf32>
    %387 = vector.extract_strided_slice %386 {offsets = [0, 0], sizes = [1, 1], strides = [1, 1]} : vector<1x2xf32> to vector<1x1xf32>
    %388 = arith.subf %387, %355 : vector<1x1xf32>
    %389 = vector.extract_strided_slice %386 {offsets = [0, 1], sizes = [1, 1], strides = [1, 1]} : vector<1x2xf32> to vector<1x1xf32>
    %cst_104 = arith.constant 9.99999968E-21 : f32
    %390 = vector.broadcast %cst_104 : f32 to vector<1x1xf32>
    %391 = arith.maximumf %389, %390 : vector<1x1xf32>
    %392 = tpu.reciprocal %391 {approx = true} : vector<1x1xf32> -> vector<1x1xf32>
    %393 = arith.mulf %388, %392 : vector<1x1xf32>
    %394 = arith.addf %377, %393 : vector<1x1xf32>
    %c2_i32_105 = arith.constant 2 : i32
    %cst_106 = arith.constant 0.000000e+00 : f32
    %395 = vector.broadcast %cst_106 : f32 to vector<1x1xf32>
    %396 = arith.subf %395, %394 : vector<1x1xf32>
    %397 = vector.broadcast %396 : vector<1x1xf32> to vector<8x1xf32>
    %398 = arith.mulf %397, %351 : vector<8x1xf32>
    %399 = math.exp %398 : vector<8x1xf32>
    %400 = vector.broadcast %399 : vector<8x1xf32> to vector<8x2xf32>
    %401 = arith.mulf %359, %400 : vector<8x2xf32>
    %cst_107 = arith.constant dense<0.000000e+00> : vector<2xf32>
    %402 = vector.multi_reduction <add>, %401, %cst_107 [0] : vector<8x2xf32> to vector<2xf32>
    %403 = vector.shape_cast %402 : vector<2xf32> to vector<1x2xf32>
    %404 = vector.extract_strided_slice %403 {offsets = [0, 0], sizes = [1, 1], strides = [1, 1]} : vector<1x2xf32> to vector<1x1xf32>
    %405 = arith.subf %404, %355 : vector<1x1xf32>
    %406 = vector.extract_strided_slice %403 {offsets = [0, 1], sizes = [1, 1], strides = [1, 1]} : vector<1x2xf32> to vector<1x1xf32>
    %cst_108 = arith.constant 9.99999968E-21 : f32
    %407 = vector.broadcast %cst_108 : f32 to vector<1x1xf32>
    %408 = arith.maximumf %406, %407 : vector<1x1xf32>
    %409 = tpu.reciprocal %408 {approx = true} : vector<1x1xf32> -> vector<1x1xf32>
    %410 = arith.mulf %405, %409 : vector<1x1xf32>
    %411 = arith.addf %394, %410 : vector<1x1xf32>
    %c3_i32_109 = arith.constant 3 : i32
    %cst_110 = arith.constant 0.000000e+00 : f32
    %412 = vector.broadcast %cst_110 : f32 to vector<1x1xf32>
    %413 = arith.subf %412, %411 : vector<1x1xf32>
    %414 = vector.broadcast %413 : vector<1x1xf32> to vector<8x1xf32>
    %415 = arith.mulf %414, %351 : vector<8x1xf32>
    %416 = math.exp %415 : vector<8x1xf32>
    %417 = vector.broadcast %416 : vector<8x1xf32> to vector<8x2xf32>
    %418 = arith.mulf %359, %417 : vector<8x2xf32>
    %cst_111 = arith.constant dense<0.000000e+00> : vector<2xf32>
    %419 = vector.multi_reduction <add>, %418, %cst_111 [0] : vector<8x2xf32> to vector<2xf32>
    %420 = vector.shape_cast %419 : vector<2xf32> to vector<1x2xf32>
    %421 = vector.extract_strided_slice %420 {offsets = [0, 0], sizes = [1, 1], strides = [1, 1]} : vector<1x2xf32> to vector<1x1xf32>
    %422 = arith.subf %421, %355 : vector<1x1xf32>
    %423 = vector.extract_strided_slice %420 {offsets = [0, 1], sizes = [1, 1], strides = [1, 1]} : vector<1x2xf32> to vector<1x1xf32>
    %cst_112 = arith.constant 9.99999968E-21 : f32
    %424 = vector.broadcast %cst_112 : f32 to vector<1x1xf32>
    %425 = arith.maximumf %423, %424 : vector<1x1xf32>
    %426 = tpu.reciprocal %425 {approx = true} : vector<1x1xf32> -> vector<1x1xf32>
    %427 = arith.mulf %422, %426 : vector<1x1xf32>
    %428 = arith.addf %411, %427 : vector<1x1xf32>
    %c4_i32_113 = arith.constant 4 : i32
    %cst_114 = arith.constant 0.000000e+00 : f32
    %429 = vector.broadcast %cst_114 : f32 to vector<1x1xf32>
    %430 = arith.subf %429, %428 : vector<1x1xf32>
    %431 = vector.broadcast %430 : vector<1x1xf32> to vector<8x1xf32>
    %432 = arith.mulf %431, %351 : vector<8x1xf32>
    %433 = math.exp %432 : vector<8x1xf32>
    %434 = vector.broadcast %433 : vector<8x1xf32> to vector<8x2xf32>
    %435 = arith.mulf %359, %434 : vector<8x2xf32>
    %cst_115 = arith.constant dense<0.000000e+00> : vector<2xf32>
    %436 = vector.multi_reduction <add>, %435, %cst_115 [0] : vector<8x2xf32> to vector<2xf32>
    %437 = vector.shape_cast %436 : vector<2xf32> to vector<1x2xf32>
    %438 = vector.extract_strided_slice %437 {offsets = [0, 0], sizes = [1, 1], strides = [1, 1]} : vector<1x2xf32> to vector<1x1xf32>
    %439 = arith.subf %438, %355 : vector<1x1xf32>
    %440 = vector.extract_strided_slice %437 {offsets = [0, 1], sizes = [1, 1], strides = [1, 1]} : vector<1x2xf32> to vector<1x1xf32>
    %cst_116 = arith.constant 9.99999968E-21 : f32
    %441 = vector.broadcast %cst_116 : f32 to vector<1x1xf32>
    %442 = arith.maximumf %440, %441 : vector<1x1xf32>
    %443 = tpu.reciprocal %442 {approx = true} : vector<1x1xf32> -> vector<1x1xf32>
    %444 = arith.mulf %439, %443 : vector<1x1xf32>
    %445 = arith.addf %428, %444 : vector<1x1xf32>
    %c5_i32_117 = arith.constant 5 : i32
    %cst_118 = arith.constant 0.000000e+00 : f32
    %446 = vector.broadcast %cst_118 : f32 to vector<1x1xf32>
    %447 = arith.subf %446, %445 : vector<1x1xf32>
    %448 = vector.broadcast %447 : vector<1x1xf32> to vector<8x1xf32>
    %449 = arith.mulf %448, %351 : vector<8x1xf32>
    %450 = math.exp %449 : vector<8x1xf32>
    %451 = vector.broadcast %450 : vector<8x1xf32> to vector<8x2xf32>
    %452 = arith.mulf %359, %451 : vector<8x2xf32>
    %cst_119 = arith.constant dense<0.000000e+00> : vector<2xf32>
    %453 = vector.multi_reduction <add>, %452, %cst_119 [0] : vector<8x2xf32> to vector<2xf32>
    %454 = vector.shape_cast %453 : vector<2xf32> to vector<1x2xf32>
    %455 = vector.extract_strided_slice %454 {offsets = [0, 0], sizes = [1, 1], strides = [1, 1]} : vector<1x2xf32> to vector<1x1xf32>
    %456 = arith.subf %455, %355 : vector<1x1xf32>
    %457 = vector.extract_strided_slice %454 {offsets = [0, 1], sizes = [1, 1], strides = [1, 1]} : vector<1x2xf32> to vector<1x1xf32>
    %cst_120 = arith.constant 9.99999968E-21 : f32
    %458 = vector.broadcast %cst_120 : f32 to vector<1x1xf32>
    %459 = arith.maximumf %457, %458 : vector<1x1xf32>
    %460 = tpu.reciprocal %459 {approx = true} : vector<1x1xf32> -> vector<1x1xf32>
    %461 = arith.mulf %456, %460 : vector<1x1xf32>
    %462 = arith.addf %445, %461 : vector<1x1xf32>
    %cst_121 = arith.constant 0.000000e+00 : f32
    %463 = vector.broadcast %cst_121 : f32 to vector<1x1xf32>
    %464 = arith.subf %463, %462 : vector<1x1xf32>
    %465 = vector.broadcast %464 : vector<1x1xf32> to vector<8x1xf32>
    %466 = arith.mulf %465, %351 : vector<8x1xf32>
    %467 = math.exp %466 : vector<8x1xf32>
    %468 = arith.mulf %314, %467 : vector<8x1xf32>
    %469 = arith.subf %314, %468 : vector<8x1xf32>
    %470 = vector.extract_strided_slice %5 {offsets = [0, 30], sizes = [8, 10], strides = [1, 1]} : vector<8x40xf32> to vector<8x10xf32>
    %cst_122 = arith.constant dense<0xFF800000> : vector<8xf32>
    %471 = vector.multi_reduction <maximumf>, %470, %cst_122 [1] : vector<8x10xf32> to vector<8xf32>
    %472 = vector.shape_cast %471 : vector<8xf32> to vector<8x1xf32>
    %473 = vector.broadcast %472 : vector<8x1xf32> to vector<8x10xf32>
    %474 = arith.subf %470, %473 : vector<8x10xf32>
    %475 = math.exp %474 : vector<8x10xf32>
    %cst_123 = arith.constant dense<0.000000e+00> : vector<8xf32>
    %476 = vector.multi_reduction <add>, %475, %cst_123 [1] : vector<8x10xf32> to vector<8xf32>
    %477 = vector.shape_cast %476 : vector<8xf32> to vector<8x1xf32>
    %478 = vector.broadcast %477 : vector<8x1xf32> to vector<8x10xf32>
    %479 = arith.divf %475, %478 : vector<8x10xf32>
    %cst_124 = arith.constant dense<0xFF800000> : vector<8xf32>
    %480 = vector.multi_reduction <maximumf>, %479, %cst_124 [1] : vector<8x10xf32> to vector<8xf32>
    %481 = vector.shape_cast %480 : vector<8xf32> to vector<8x1xf32>
    %cst_125 = arith.constant dense<0.000000e+00> : vector<8xf32>
    %482 = vector.multi_reduction <add>, %479, %cst_125 [1] : vector<8x10xf32> to vector<8xf32>
    %483 = vector.shape_cast %482 : vector<8xf32> to vector<8x1xf32>
    %cst_126 = arith.constant 1.000000e+00 : f32
    %484 = vector.broadcast %cst_126 : f32 to vector<8x1xf32>
    %485 = arith.subf %484, %481 : vector<8x1xf32>
    %486 = arith.subf %483, %481 : vector<8x1xf32>
    %cst_127 = arith.constant 9.000000e+00 : f32
    %487 = vector.broadcast %cst_127 : f32 to vector<8x1xf32>
    %488 = arith.divf %486, %487 : vector<8x1xf32>
    %489 = arith.subf %485, %488 : vector<8x1xf32>
    %cst_128 = arith.constant 9.99999974E-6 : f32
    %490 = vector.broadcast %cst_128 : f32 to vector<8x1xf32>
    %491 = arith.addf %489, %490 : vector<8x1xf32>
    %492 = math.log %491 : vector<8x1xf32>
    %cst_129 = arith.constant 0.000000e+00 : f32
    %493 = vector.broadcast %cst_129 : f32 to vector<8x1xf32>
    %494 = arith.subf %493, %492 : vector<8x1xf32>
    %cst_130 = arith.constant 0.000000e+00 : f32
    %495 = vector.broadcast %cst_130 : f32 to vector<8x1xf32>
    %496 = arith.maximumf %494, %495 : vector<8x1xf32>
    %cst_131 = arith.constant dense<0xFF800000> : vector<1xf32>
    %497 = vector.multi_reduction <maximumf>, %496, %cst_131 [0] : vector<8x1xf32> to vector<1xf32>
    %498 = vector.shape_cast %497 : vector<1xf32> to vector<1x1xf32>
    %499 = vector.broadcast %498 : vector<1x1xf32> to vector<8x1xf32>
    %500 = arith.subf %496, %499 : vector<8x1xf32>
    %501 = math.exp %500 : vector<8x1xf32>
    %cst_132 = arith.constant dense<0.000000e+00> : vector<1xf32>
    %502 = vector.multi_reduction <add>, %501, %cst_132 [0] : vector<8x1xf32> to vector<1xf32>
    %503 = vector.shape_cast %502 : vector<1xf32> to vector<1x1xf32>
    %504 = vector.broadcast %503 : vector<1x1xf32> to vector<8x1xf32>
    %505 = arith.divf %501, %504 : vector<8x1xf32>
    %506 = tpu.concatenate %161, %315, %469, %468 in 1 : vector<8x1xf32>, vector<8x1xf32>, vector<8x1xf32>, vector<8x1xf32> -> vector<8x4xf32>
    %c0_133 = arith.constant 0 : index
    %c0_134 = arith.constant 0 : index
    %507 = vector.load %arg4[%c0_133, %c0_134] : memref<8x4xf32, #tpu.memory_space<vmem>>, vector<8x4xf32>
    tpu.vector_store %arg4[%c0_133, %c0_134], %506 {strides = array<i32>} : memref<8x4xf32, #tpu.memory_space<vmem>>, vector<8x4xf32>,
    %508 = tpu.concatenate %43, %197, %351, %505 in 1 : vector<8x1xf32>, vector<8x1xf32>, vector<8x1xf32>, vector<8x1xf32> -> vector<8x4xf32>
    %c0_135 = arith.constant 0 : index
    %c0_136 = arith.constant 0 : index
    %509 = vector.load %arg5[%c0_135, %c0_136] : memref<8x4xf32, #tpu.memory_space<vmem>>, vector<8x4xf32>
    tpu.vector_store %arg5[%c0_135, %c0_136], %508 {strides = array<i32>} : memref<8x4xf32, #tpu.memory_space<vmem>>, vector<8x4xf32>,
    return
  }
}

</mosaic_0001>

<llo_original>
// kernel: tpu_custom_call.1
$region0: #{tpu_custom_call.1}
  #allocation0 [shape = 'u32[]', space=smem, size = 0x4, offset = 0x4, fixed_abs, tag = 'smem constant byte address 0x4 - core index']
  #allocation1 [shape = 'u32[144,128]{1,0:T(1,128)}', space=vmem, size = 0x12000, scoped, tag = 'internal scratch']
  %s0 = inlined_call_operand.vmem [shape: bf16[8,1024], index: 0, kind: input, shape index: {}]
  %s1 = inlined_call_operand.vmem [shape: bf16[1024,40], index: 1, kind: input, shape index: {}]
  %s2 = inlined_call_operand.vmem [shape: f32[1,40], index: 2, kind: input, shape index: {}]
  %s3 = inlined_call_operand.hbm [shape: f32[8,40], index: 3, kind: output, shape index: {0}]
  %s4 = inlined_call_operand.vmem [shape: f32[8,4], index: 4, kind: output, shape index: {1}]
  %s5 = inlined_call_operand.vmem [shape: f32[8,4], index: 5, kind: output, shape index: {2}]
  %6 = xla_tuple %s3, %s4, %s5
  %s7 = sld [smem:[#allocation0]]
  $region38: #{tpu_custom_call.1} parent=0
    _
  %s9 = ssub.s32 1, %s7
  %s10 = scalar_select 0, %s9, %s7
  $region1: #{tpu_custom_call.1} parent=0
    #allocation2 [shape = 'u8[4096]{0}', space=vmem, size = 0x1000, scoped, tag = 'output window, operand 0, single buffered']
    #allocation3 [shape = 's32[1]{0}', space=sflag, size = 0x4, scoped, tag = 'scoped memory for tpu_custom_call.1']
    %11 = vsyncpa [#allocation3], 0
    // Predicated region
    $region2: #{tpu_custom_call.1} parent=1 // pred_check
      _
    $region3: #{tpu_custom_call.1} parent=1 // pred_check_branch
      %13 = sbr.rel (0) target = $region5
    $region4: #{tpu_custom_call.1} parent=1 // pred_region
      _
    $region5: #{tpu_custom_call.1} parent=1 // pred_fallthru
      _
    // Predicated region
    $region6: #{tpu_custom_call.1} parent=1 // pred_check
      _
    $region7: #{tpu_custom_call.1} parent=1 // pred_check_branch
      %15 = sbr.rel (0) target = $region9
    $region8: #{tpu_custom_call.1} parent=1 // pred_region
      _
    $region9: #{tpu_custom_call.1} parent=1 // pred_fallthru
      _
    // Predicated region
    $region10: #{tpu_custom_call.1} parent=1 // pred_check
      _
    $region11: #{tpu_custom_call.1} parent=1 // pred_check_branch
      %17 = sbr.rel (0) target = $region13
    $region12: #{tpu_custom_call.1} parent=1 // pred_region
      _
    $region13: #{tpu_custom_call.1} parent=1 // pred_fallthru
      _
    %v19 = vld [vmem:[%s0] sm:$0xff]
    %v20 = vld [vmem:[%s0 + $0x8] sm:$0xff]
    %v21 = vld [vmem:[%s0 + $0x10] sm:$0xff]
    %v22 = vld [vmem:[%s0 + $0x18] sm:$0xff]
    %v23 = vld [vmem:[%s1] sm:$0xf]
    %v24 = vld [vmem:[%s1 + $0x4] sm:$0xf]
    %v25 = vld [vmem:[%s1 + $0x8] sm:$0xf]
    %v26 = vld [vmem:[%s1 + $0xc] sm:$0xf]
    %v27 = vld [vmem:[%s1 + $0x10] sm:$0xf]
    %v28 = vld [vmem:[%s1 + $0x14] sm:$0xf]
    %v29 = vld [vmem:[%s1 + $0x18] sm:$0xf]
    %v30 = vld [vmem:[%s1 + $0x1c] sm:$0xf]
    %v31 = vld [vmem:[%s1 + $0x20] sm:$0xf]
    %v32 = vld [vmem:[%s1 + $0x24] sm:$0xf]
    %v33 = vld [vmem:[%s1 + $0x28] sm:$0xf]
    %v34 = vld [vmem:[%s1 + $0x2c] sm:$0xf]
    %v35 = vld [vmem:[%s1 + $0x30] sm:$0xf]
    %v36 = vld [vmem:[%s1 + $0x34] sm:$0xf]
    %v37 = vld [vmem:[%s1 + $0x38] sm:$0xf]
    %v38 = vld [vmem:[%s1 + $0x3c] sm:$0xf]
    %v39 = vld [vmem:[%s1 + $0x40] sm:$0xf]
    %v40 = vld [vmem:[%s1 + $0x44] sm:$0xf]
    %v41 = vld [vmem:[%s1 + $0x48] sm:$0xf]
    %v42 = vld [vmem:[%s1 + $0x4c] sm:$0xf]
    %v43 = vld [vmem:[%s1 + $0x50] sm:$0xf]
    %v44 = vld [vmem:[%s1 + $0x54] sm:$0xf]
    %v45 = vld [vmem:[%s1 + $0x58] sm:$0xf]
    %v46 = vld [vmem:[%s1 + $0x5c] sm:$0xf]
    %v47 = vld [vmem:[%s1 + $0x60] sm:$0xf]
    %v48 = vld [vmem:[%s1 + $0x64] sm:$0xf]
    %v49 = vld [vmem:[%s1 + $0x68] sm:$0xf]
    %v50 = vld [vmem:[%s1 + $0x6c] sm:$0xf]
    %v51 = vld [vmem:[%s1 + $0x70] sm:$0xf]
    %v52 = vld [vmem:[%s1 + $0x74] sm:$0xf]
    %v53 = vld [vmem:[%s1 + $0x78] sm:$0xf]
    %v54 = vld [vmem:[%s1 + $0x7c] sm:$0xf]
    %v55 = vld [vmem:[%s1 + $0x80] sm:$0xf]
    %v56 = vld [vmem:[%s1 + $0x84] sm:$0xf]
    %v57 = vld [vmem:[%s1 + $0x88] sm:$0xf]
    %v58 = vld [vmem:[%s1 + $0x8c] sm:$0xf]
    %v59 = vld [vmem:[%s1 + $0x90] sm:$0xf]
    %v60 = vld [vmem:[%s1 + $0x94] sm:$0xf]
    %v61 = vld [vmem:[%s1 + $0x98] sm:$0xf]
    %v62 = vld [vmem:[%s1 + $0x9c] sm:$0xf]
    %v63 = vld [vmem:[%s1 + $0xa0] sm:$0xf]
    %v64 = vld [vmem:[%s1 + $0xa4] sm:$0xf]
    %v65 = vld [vmem:[%s1 + $0xa8] sm:$0xf]
    %v66 = vld [vmem:[%s1 + $0xac] sm:$0xf]
    %v67 = vld [vmem:[%s1 + $0xb0] sm:$0xf]
    %v68 = vld [vmem:[%s1 + $0xb4] sm:$0xf]
    %v69 = vld [vmem:[%s1 + $0xb8] sm:$0xf]
    %v70 = vld [vmem:[%s1 + $0xbc] sm:$0xf]
    %v71 = vld [vmem:[%s1 + $0xc0] sm:$0xf]
    %v72 = vld [vmem:[%s1 + $0xc4] sm:$0xf]
    %v73 = vld [vmem:[%s1 + $0xc8] sm:$0xf]
    %v74 = vld [vmem:[%s1 + $0xcc] sm:$0xf]
    %v75 = vld [vmem:[%s1 + $0xd0] sm:$0xf]
    %v76 = vld [vmem:[%s1 + $0xd4] sm:$0xf]
    %v77 = vld [vmem:[%s1 + $0xd8] sm:$0xf]
    %v78 = vld [vmem:[%s1 + $0xdc] sm:$0xf]
    %v79 = vld [vmem:[%s1 + $0xe0] sm:$0xf]
    %v80 = vld [vmem:[%s1 + $0xe4] sm:$0xf]
    %v81 = vld [vmem:[%s1 + $0xe8] sm:$0xf]
    %v82 = vld [vmem:[%s1 + $0xec] sm:$0xf]
    %v83 = vld [vmem:[%s1 + $0xf0] sm:$0xf]
    %v84 = vld [vmem:[%s1 + $0xf4] sm:$0xf]
    %v85 = vld [vmem:[%s1 + $0xf8] sm:$0xf]
    %v86 = vld [vmem:[%s1 + $0xfc] sm:$0xf]
    %v87 = vld [vmem:[%s1 + $0x100] sm:$0xf]
    %v88 = vld [vmem:[%s1 + $0x104] sm:$0xf]
    %v89 = vld [vmem:[%s1 + $0x108] sm:$0xf]
    %v90 = vld [vmem:[%s1 + $0x10c] sm:$0xf]
    %v91 = vld [vmem:[%s1 + $0x110] sm:$0xf]
    %v92 = vld [vmem:[%s1 + $0x114] sm:$0xf]
    %v93 = vld [vmem:[%s1 + $0x118] sm:$0xf]
    %v94 = vld [vmem:[%s1 + $0x11c] sm:$0xf]
    %v95 = vld [vmem:[%s1 + $0x120] sm:$0xf]
    %v96 = vld [vmem:[%s1 + $0x124] sm:$0xf]
    %v97 = vld [vmem:[%s1 + $0x128] sm:$0xf]
    %v98 = vld [vmem:[%s1 + $0x12c] sm:$0xf]
    %v99 = vld [vmem:[%s1 + $0x130] sm:$0xf]
    %v100 = vld [vmem:[%s1 + $0x134] sm:$0xf]
    %v101 = vld [vmem:[%s1 + $0x138] sm:$0xf]
    %v102 = vld [vmem:[%s1 + $0x13c] sm:$0xf]
    %v103 = vld [vmem:[%s1 + $0x140] sm:$0xf]
    %v104 = vld [vmem:[%s1 + $0x144] sm:$0xf]
    %v105 = vld [vmem:[%s1 + $0x148] sm:$0xf]
    %v106 = vld [vmem:[%s1 + $0x14c] sm:$0xf]
    %v107 = vld [vmem:[%s1 + $0x150] sm:$0xf]
    %v108 = vld [vmem:[%s1 + $0x154] sm:$0xf]
    %v109 = vld [vmem:[%s1 + $0x158] sm:$0xf]
    %v110 = vld [vmem:[%s1 + $0x15c] sm:$0xf]
    %v111 = vld [vmem:[%s1 + $0x160] sm:$0xf]
    %v112 = vld [vmem:[%s1 + $0x164] sm:$0xf]
    %v113 = vld [vmem:[%s1 + $0x168] sm:$0xf]
    %v114 = vld [vmem:[%s1 + $0x16c] sm:$0xf]
    %v115 = vld [vmem:[%s1 + $0x170] sm:$0xf]
    %v116 = vld [vmem:[%s1 + $0x174] sm:$0xf]
    %v117 = vld [vmem:[%s1 + $0x178] sm:$0xf]
    %v118 = vld [vmem:[%s1 + $0x17c] sm:$0xf]
    %v119 = vld [vmem:[%s1 + $0x180] sm:$0xf]
    %v120 = vld [vmem:[%s1 + $0x184] sm:$0xf]
    %v121 = vld [vmem:[%s1 + $0x188] sm:$0xf]
    %v122 = vld [vmem:[%s1 + $0x18c] sm:$0xf]
    %v123 = vld [vmem:[%s1 + $0x190] sm:$0xf]
    %v124 = vld [vmem:[%s1 + $0x194] sm:$0xf]
    %v125 = vld [vmem:[%s1 + $0x198] sm:$0xf]
    %v126 = vld [vmem:[%s1 + $0x19c] sm:$0xf]
    %v127 = vld [vmem:[%s1 + $0x1a0] sm:$0xf]
    %v128 = vld [vmem:[%s1 + $0x1a4] sm:$0xf]
    %v129 = vld [vmem:[%s1 + $0x1a8] sm:$0xf]
    %v130 = vld [vmem:[%s1 + $0x1ac] sm:$0xf]
    %v131 = vld [vmem:[%s1 + $0x1b0] sm:$0xf]
    %v132 = vld [vmem:[%s1 + $0x1b4] sm:$0xf]
    %v133 = vld [vmem:[%s1 + $0x1b8] sm:$0xf]
    %v134 = vld [vmem:[%s1 + $0x1bc] sm:$0xf]
    %v135 = vld [vmem:[%s1 + $0x1c0] sm:$0xf]
    %v136 = vld [vmem:[%s1 + $0x1c4] sm:$0xf]
    %v137 = vld [vmem:[%s1 + $0x1c8] sm:$0xf]
    %v138 = vld [vmem:[%s1 + $0x1cc] sm:$0xf]
    %v139 = vld [vmem:[%s1 + $0x1d0] sm:$0xf]
    %v140 = vld [vmem:[%s1 + $0x1d4] sm:$0xf]
    %v141 = vld [vmem:[%s1 + $0x1d8] sm:$0xf]
    %v142 = vld [vmem:[%s1 + $0x1dc] sm:$0xf]
    %v143 = vld [vmem:[%s1 + $0x1e0] sm:$0xf]
    %v144 = vld [vmem:[%s1 + $0x1e4] sm:$0xf]
    %v145 = vld [vmem:[%s1 + $0x1e8] sm:$0xf]
    %v146 = vld [vmem:[%s1 + $0x1ec] sm:$0xf]
    %v147 = vld [vmem:[%s1 + $0x1f0] sm:$0xf]
    %v148 = vld [vmem:[%s1 + $0x1f4] sm:$0xf]
    %v149 = vld [vmem:[%s1 + $0x1f8] sm:$0xf]
    %v150 = vld [vmem:[%s1 + $0x1fc] sm:$0xf]
    %v151 = vld [vmem:[%s2] sm:$0x1]
    %v153 = vlaneseq
    %v154 = vshrl.u32 %v153, 7
    %v155 = vsub.s32 0, %v154
    %v156 = vrot.slane %v151, %v155
    %v162 = vunpack.c.l.b16 %v19
    %v163 = vunpack.c.h.b16 %v19
    %v164 = vunpack.c.l.b16 %v20
    %v165 = vunpack.c.h.b16 %v20
    %v166 = vunpack.c.l.b16 %v21
    %v167 = vunpack.c.h.b16 %v21
    %v168 = vunpack.c.l.b16 %v22
    %v169 = vunpack.c.h.b16 %v22
    %v170 = vpack.c.b16 %v162, %v162
    %v171 = vpack.c.b16 %v163, %v163
    %v172 = vpack.c.b16 %v164, %v164
    %v173 = vpack.c.b16 %v165, %v165
    %v174 = vpack.c.b16 %v166, %v166
    %v175 = vpack.c.b16 %v167, %v167
    %v176 = vpack.c.b16 %v168, %v168
    %v177 = vpack.c.b16 %v169, %v169
    %v314 = vunpack.c.l.b16 %v23
    %v315 = vunpack.c.l.b16 %v24
    %v316 = vunpack.c.l.b16 %v25
    %v317 = vunpack.c.l.b16 %v26
    %v318 = vunpack.c.l.b16 %v27
    %v319 = vunpack.c.l.b16 %v28
    %v320 = vunpack.c.l.b16 %v29
    %v321 = vunpack.c.l.b16 %v30
    %v322 = vunpack.c.l.b16 %v31
    %v323 = vunpack.c.l.b16 %v32
    %v324 = vunpack.c.l.b16 %v33
    %v325 = vunpack.c.l.b16 %v34
    %v326 = vunpack.c.l.b16 %v35
    %v327 = vunpack.c.l.b16 %v36
    %v328 = vunpack.c.l.b16 %v37
    %v329 = vunpack.c.l.b16 %v38
    %v330 = vunpack.c.l.b16 %v39
    %v331 = vunpack.c.l.b16 %v40
    %v332 = vunpack.c.l.b16 %v41
    %v333 = vunpack.c.l.b16 %v42
    %v334 = vunpack.c.l.b16 %v43
    %v335 = vunpack.c.l.b16 %v44
    %v336 = vunpack.c.l.b16 %v45
    %v337 = vunpack.c.l.b16 %v46
    %v338 = vunpack.c.l.b16 %v47
    %v339 = vunpack.c.l.b16 %v48
    %v340 = vunpack.c.l.b16 %v49
    %v341 = vunpack.c.l.b16 %v50
    %v342 = vunpack.c.l.b16 %v51
    %v343 = vunpack.c.l.b16 %v52
    %v344 = vunpack.c.l.b16 %v53
    %v345 = vunpack.c.l.b16 %v54
    %v346 = vunpack.c.l.b16 %v55
    %v347 = vunpack.c.l.b16 %v56
    %v348 = vunpack.c.l.b16 %v57
    %v349 = vunpack.c.l.b16 %v58
    %v350 = vunpack.c.l.b16 %v59
    %v351 = vunpack.c.l.b16 %v60
    %v352 = vunpack.c.l.b16 %v61
    %v353 = vunpack.c.l.b16 %v62
    %v354 = vunpack.c.l.b16 %v63
    %v355 = vunpack.c.l.b16 %v64
    %v356 = vunpack.c.l.b16 %v65
    %v357 = vunpack.c.l.b16 %v66
    %v358 = vunpack.c.l.b16 %v67
    %v359 = vunpack.c.l.b16 %v68
    %v360 = vunpack.c.l.b16 %v69
    %v361 = vunpack.c.l.b16 %v70
    %v362 = vunpack.c.l.b16 %v71
    %v363 = vunpack.c.l.b16 %v72
    %v364 = vunpack.c.l.b16 %v73
    %v365 = vunpack.c.l.b16 %v74
    %v366 = vunpack.c.l.b16 %v75
    %v367 = vunpack.c.l.b16 %v76
    %v368 = vunpack.c.l.b16 %v77
    %v369 = vunpack.c.l.b16 %v78
    %v370 = vunpack.c.l.b16 %v79
    %v371 = vunpack.c.l.b16 %v80
    %v372 = vunpack.c.l.b16 %v81
    %v373 = vunpack.c.l.b16 %v82
    %v374 = vunpack.c.l.b16 %v83
    %v375 = vunpack.c.l.b16 %v84
    %v376 = vunpack.c.l.b16 %v85
    %v377 = vunpack.c.l.b16 %v86
    %v378 = vunpack.c.l.b16 %v87
    %v379 = vunpack.c.l.b16 %v88
    %v380 = vunpack.c.l.b16 %v89
    %v381 = vunpack.c.l.b16 %v90
    %v382 = vunpack.c.l.b16 %v91
    %v383 = vunpack.c.l.b16 %v92
    %v384 = vunpack.c.l.b16 %v93
    %v385 = vunpack.c.l.b16 %v94
    %v386 = vunpack.c.l.b16 %v95
    %v387 = vunpack.c.l.b16 %v96
    %v388 = vunpack.c.l.b16 %v97
    %v389 = vunpack.c.l.b16 %v98
    %v390 = vunpack.c.l.b16 %v99
    %v391 = vunpack.c.l.b16 %v100
    %v392 = vunpack.c.l.b16 %v101
    %v393 = vunpack.c.l.b16 %v102
    %v394 = vunpack.c.l.b16 %v103
    %v395 = vunpack.c.l.b16 %v104
    %v396 = vunpack.c.l.b16 %v105
    %v397 = vunpack.c.l.b16 %v106
    %v398 = vunpack.c.l.b16 %v107
    %v399 = vunpack.c.l.b16 %v108
    %v400 = vunpack.c.l.b16 %v109
    %v401 = vunpack.c.l.b16 %v110
    %v402 = vunpack.c.l.b16 %v111
    %v403 = vunpack.c.l.b16 %v112
    %v404 = vunpack.c.l.b16 %v113
    %v405 = vunpack.c.l.b16 %v114
    %v406 = vunpack.c.l.b16 %v115
    %v407 = vunpack.c.l.b16 %v116
    %v408 = vunpack.c.l.b16 %v117
    %v409 = vunpack.c.l.b16 %v118
    %v410 = vunpack.c.l.b16 %v119
    %v411 = vunpack.c.l.b16 %v120
    %v412 = vunpack.c.l.b16 %v121
    %v413 = vunpack.c.l.b16 %v122
    %v414 = vunpack.c.l.b16 %v123
    %v415 = vunpack.c.l.b16 %v124
    %v416 = vunpack.c.l.b16 %v125
    %v417 = vunpack.c.l.b16 %v126
    %v418 = vunpack.c.l.b16 %v127
    %v419 = vunpack.c.l.b16 %v128
    %v420 = vunpack.c.l.b16 %v129
    %v421 = vunpack.c.l.b16 %v130
    %v422 = vunpack.c.l.b16 %v131
    %v423 = vunpack.c.l.b16 %v132
    %v424 = vunpack.c.l.b16 %v133
    %v425 = vunpack.c.l.b16 %v134
    %v426 = vunpack.c.l.b16 %v135
    %v427 = vunpack.c.l.b16 %v136
    %v428 = vunpack.c.l.b16 %v137
    %v429 = vunpack.c.l.b16 %v138
    %v430 = vunpack.c.l.b16 %v139
    %v431 = vunpack.c.l.b16 %v140
    %v432 = vunpack.c.l.b16 %v141
    %v433 = vunpack.c.l.b16 %v142
    %v434 = vunpack.c.l.b16 %v143
    %v435 = vunpack.c.l.b16 %v144
    %v436 = vunpack.c.l.b16 %v145
    %v437 = vunpack.c.l.b16 %v146
    %v438 = vunpack.c.l.b16 %v147
    %v439 = vunpack.c.l.b16 %v148
    %v440 = vunpack.c.l.b16 %v149
    %v441 = vunpack.c.l.b16 %v150
    %v442 = vpack.c.b16 %v315, %v314
    %v443 = vpack.c.b16 %v317, %v316
    %v444 = vpack.c.b16 %v319, %v318
    %v445 = vpack.c.b16 %v321, %v320
    %v446 = vpack.c.b16 %v323, %v322
    %v447 = vpack.c.b16 %v325, %v324
    %v448 = vpack.c.b16 %v327, %v326
    %v449 = vpack.c.b16 %v329, %v328
    %v450 = vpack.c.b16 %v331, %v330
    %v451 = vpack.c.b16 %v333, %v332
    %v452 = vpack.c.b16 %v335, %v334
    %v453 = vpack.c.b16 %v337, %v336
    %v454 = vpack.c.b16 %v339, %v338
    %v455 = vpack.c.b16 %v341, %v340
    %v456 = vpack.c.b16 %v343, %v342
    %v457 = vpack.c.b16 %v345, %v344
    %v458 = vpack.c.b16 %v347, %v346
    %v459 = vpack.c.b16 %v349, %v348
    %v460 = vpack.c.b16 %v351, %v350
    %v461 = vpack.c.b16 %v353, %v352
    %v462 = vpack.c.b16 %v355, %v354
    %v463 = vpack.c.b16 %v357, %v356
    %v464 = vpack.c.b16 %v359, %v358
    %v465 = vpack.c.b16 %v361, %v360
    %v466 = vpack.c.b16 %v363, %v362
    %v467 = vpack.c.b16 %v365, %v364
    %v468 = vpack.c.b16 %v367, %v366
    %v469 = vpack.c.b16 %v369, %v368
    %v470 = vpack.c.b16 %v371, %v370
    %v471 = vpack.c.b16 %v373, %v372
    %v472 = vpack.c.b16 %v375, %v374
    %v473 = vpack.c.b16 %v377, %v376
    %v474 = vpack.c.b16 %v379, %v378
    %v475 = vpack.c.b16 %v381, %v380
    %v476 = vpack.c.b16 %v383, %v382
    %v477 = vpack.c.b16 %v385, %v384
    %v478 = vpack.c.b16 %v387, %v386
    %v479 = vpack.c.b16 %v389, %v388
    %v480 = vpack.c.b16 %v391, %v390
    %v481 = vpack.c.b16 %v393, %v392
    %v482 = vpack.c.b16 %v395, %v394
    %v483 = vpack.c.b16 %v397, %v396
    %v484 = vpack.c.b16 %v399, %v398
    %v485 = vpack.c.b16 %v401, %v400
    %v486 = vpack.c.b16 %v403, %v402
    %v487 = vpack.c.b16 %v405, %v404
    %v488 = vpack.c.b16 %v407, %v406
    %v489 = vpack.c.b16 %v409, %v408
    %v490 = vpack.c.b16 %v411, %v410
    %v491 = vpack.c.b16 %v413, %v412
    %v492 = vpack.c.b16 %v415, %v414
    %v493 = vpack.c.b16 %v417, %v416
    %v494 = vpack.c.b16 %v419, %v418
    %v495 = vpack.c.b16 %v421, %v420
    %v496 = vpack.c.b16 %v423, %v422
    %v497 = vpack.c.b16 %v425, %v424
    %v498 = vpack.c.b16 %v427, %v426
    %v499 = vpack.c.b16 %v429, %v428
    %v500 = vpack.c.b16 %v431, %v430
    %v501 = vpack.c.b16 %v433, %v432
    %v502 = vpack.c.b16 %v435, %v434
    %v503 = vpack.c.b16 %v437, %v436
    %v504 = vpack.c.b16 %v439, %v438
    %v505 = vpack.c.b16 %v441, %v440
    %570 = vmatprep.subr.bf16.mxu0 0
    %571 = vmatpush1.bf16.msra.mxu0 %v449
    %572 = vmatprep.subr.bf16.mxu0 0
    %573 = vmatpush1.bf16.msra.mxu0 %v448
    %574 = vmatprep.subr.bf16.mxu0 0
    %575 = vmatpush1.bf16.msra.mxu0 %v447
    %576 = vmatprep.subr.bf16.mxu0 0
    %577 = vmatpush1.bf16.msra.mxu0 %v446
    %578 = vmatprep.subr.bf16.mxu0 0
    %579 = vmatpush1.bf16.msra.mxu0 %v445
    %580 = vmatprep.subr.bf16.mxu0 0
    %581 = vmatpush1.bf16.msra.mxu0 %v444
    %582 = vmatprep.subr.bf16.mxu0 0
    %583 = vmatpush1.bf16.msra.mxu0 %v443
    %584 = vmatprep.subr.bf16.mxu0 0
    %585 = vmatpush1.bf16.msra.mxu0 %v442
    %586 = vmatprep.subr.bf16.mxu0 0
    %587 = vmatpush2.bf16.msra.mxu0 %v457
    %588 = vmatprep.subr.bf16.mxu0 0
    %589 = vmatpush2.bf16.msra.mxu0 %v456
    %590 = vmatprep.subr.bf16.mxu0 0
    %591 = vmatpush2.bf16.msra.mxu0 %v455
    %592 = vmatprep.subr.bf16.mxu0 0
    %593 = vmatpush2.bf16.msra.mxu0 %v454
    %594 = vmatprep.subr.bf16.mxu0 0
    %595 = vmatpush2.bf16.msra.mxu0 %v453
    %596 = vmatprep.subr.bf16.mxu0 0
    %597 = vmatpush2.bf16.msra.mxu0 %v452
    %598 = vmatprep.subr.bf16.mxu0 0
    %599 = vmatpush2.bf16.msra.mxu0 %v451
    %600 = vmatprep.subr.bf16.mxu0 0
    %601 = vmatpush2.bf16.msra.mxu0 %v450
    %602 = vmatprep.mubr.bf16.mxu0 %v171
    %603 = vmatmul.mubr.bf16.gmra.mxu0 %v170
    %v604 = vpop.f32.mrf.mxu0
    %v605 = vadd.f32 %v156, %v604
    %v606 = vpop.f32.mrf.mxu0
    %v607 = vpop.f32.mrf.mxu0
    %v608 = vpop.f32.mrf.mxu0
    %609 = vdwg.mxu0
    %610 = vmatprep.subr.bf16.mxu0 0
    %611 = vmatpush1.bf16.msra.mxu0 %v465
    %612 = vmatprep.subr.bf16.mxu0 0
    %613 = vmatpush1.bf16.msra.mxu0 %v464
    %614 = vmatprep.subr.bf16.mxu0 0
    %615 = vmatpush1.bf16.msra.mxu0 %v463
    %616 = vmatprep.subr.bf16.mxu0 0
    %617 = vmatpush1.bf16.msra.mxu0 %v462
    %618 = vmatprep.subr.bf16.mxu0 0
    %619 = vmatpush1.bf16.msra.mxu0 %v461
    %620 = vmatprep.subr.bf16.mxu0 0
    %621 = vmatpush1.bf16.msra.mxu0 %v460
    %622 = vmatprep.subr.bf16.mxu0 0
    %623 = vmatpush1.bf16.msra.mxu0 %v459
    %624 = vmatprep.subr.bf16.mxu0 0
    %625 = vmatpush1.bf16.msra.mxu0 %v458
    %626 = vmatprep.subr.bf16.mxu0 0
    %627 = vmatpush2.bf16.msra.mxu0 %v473
    %628 = vmatprep.subr.bf16.mxu0 0
    %629 = vmatpush2.bf16.msra.mxu0 %v472
    %630 = vmatprep.subr.bf16.mxu0 0
    %631 = vmatpush2.bf16.msra.mxu0 %v471
    %632 = vmatprep.subr.bf16.mxu0 0
    %633 = vmatpush2.bf16.msra.mxu0 %v470
    %634 = vmatprep.subr.bf16.mxu0 0
    %635 = vmatpush2.bf16.msra.mxu0 %v469
    %636 = vmatprep.subr.bf16.mxu0 0
    %637 = vmatpush2.bf16.msra.mxu0 %v468
    %638 = vmatprep.subr.bf16.mxu0 0
    %639 = vmatpush2.bf16.msra.mxu0 %v467
    %640 = vmatprep.subr.bf16.mxu0 0
    %641 = vmatpush2.bf16.msra.mxu0 %v466
    %642 = vmatprep.mubr.bf16.mxu0 %v173
    %643 = vmatmul.mubr.bf16.gmra.mxu0 %v172
    %v644 = vpop.f32.mrf.mxu0
    %v645 = vadd.f32 %v605, %v644
    %v646 = vpop.f32.mrf.mxu0
    %v647 = vpop.f32.mrf.mxu0
    %v648 = vpop.f32.mrf.mxu0
    %649 = vdwg.mxu0
    %650 = vmatprep.subr.bf16.mxu0 0
    %651 = vmatpush1.bf16.msra.mxu0 %v481
    %652 = vmatprep.subr.bf16.mxu0 0
    %653 = vmatpush1.bf16.msra.mxu0 %v480
    %654 = vmatprep.subr.bf16.mxu0 0
    %655 = vmatpush1.bf16.msra.mxu0 %v479
    %656 = vmatprep.subr.bf16.mxu0 0
    %657 = vmatpush1.bf16.msra.mxu0 %v478
    %658 = vmatprep.subr.bf16.mxu0 0
    %659 = vmatpush1.bf16.msra.mxu0 %v477
    %660 = vmatprep.subr.bf16.mxu0 0
    %661 = vmatpush1.bf16.msra.mxu0 %v476
    %662 = vmatprep.subr.bf16.mxu0 0
    %663 = vmatpush1.bf16.msra.mxu0 %v475
    %664 = vmatprep.subr.bf16.mxu0 0
    %665 = vmatpush1.bf16.msra.mxu0 %v474
    %666 = vmatprep.subr.bf16.mxu0 0
    %667 = vmatpush2.bf16.msra.mxu0 %v489
    %668 = vmatprep.subr.bf16.mxu0 0
    %669 = vmatpush2.bf16.msra.mxu0 %v488
    %670 = vmatprep.subr.bf16.mxu0 0
    %671 = vmatpush2.bf16.msra.mxu0 %v487
    %672 = vmatprep.subr.bf16.mxu0 0
    %673 = vmatpush2.bf16.msra.mxu0 %v486
    %674 = vmatprep.subr.bf16.mxu0 0
    %675 = vmatpush2.bf16.msra.mxu0 %v485
    %676 = vmatprep.subr.bf16.mxu0 0
    %677 = vmatpush2.bf16.msra.mxu0 %v484
    %678 = vmatprep.subr.bf16.mxu0 0
    %679 = vmatpush2.bf16.msra.mxu0 %v483
    %680 = vmatprep.subr.bf16.mxu0 0
    %681 = vmatpush2.bf16.msra.mxu0 %v482
    %682 = vmatprep.mubr.bf16.mxu0 %v175
    %683 = vmatmul.mubr.bf16.gmra.mxu0 %v174
    %v684 = vpop.f32.mrf.mxu0
    %v685 = vadd.f32 %v645, %v684
    %v686 = vpop.f32.mrf.mxu0
    %v687 = vpop.f32.mrf.mxu0
    %v688 = vpop.f32.mrf.mxu0
    %689 = vdwg.mxu0
    %690 = vmatprep.subr.bf16.mxu0 0
    %691 = vmatpush1.bf16.msra.mxu0 %v497
    %692 = vmatprep.subr.bf16.mxu0 0
    %693 = vmatpush1.bf16.msra.mxu0 %v496
    %694 = vmatprep.subr.bf16.mxu0 0
    %695 = vmatpush1.bf16.msra.mxu0 %v495
    %696 = vmatprep.subr.bf16.mxu0 0
    %697 = vmatpush1.bf16.msra.mxu0 %v494
    %698 = vmatprep.subr.bf16.mxu0 0
    %699 = vmatpush1.bf16.msra.mxu0 %v493
    %700 = vmatprep.subr.bf16.mxu0 0
    %701 = vmatpush1.bf16.msra.mxu0 %v492
    %702 = vmatprep.subr.bf16.mxu0 0
    %703 = vmatpush1.bf16.msra.mxu0 %v491
    %704 = vmatprep.subr.bf16.mxu0 0
    %705 = vmatpush1.bf16.msra.mxu0 %v490
    %706 = vmatprep.subr.bf16.mxu0 0
    %707 = vmatpush2.bf16.msra.mxu0 %v505
    %708 = vmatprep.subr.bf16.mxu0 0
    %709 = vmatpush2.bf16.msra.mxu0 %v504
    %710 = vmatprep.subr.bf16.mxu0 0
    %711 = vmatpush2.bf16.msra.mxu0 %v503
    %712 = vmatprep.subr.bf16.mxu0 0
    %713 = vmatpush2.bf16.msra.mxu0 %v502
    %714 = vmatprep.subr.bf16.mxu0 0
    %715 = vmatpush2.bf16.msra.mxu0 %v501
    %716 = vmatprep.subr.bf16.mxu0 0
    %717 = vmatpush2.bf16.msra.mxu0 %v500
    %718 = vmatprep.subr.bf16.mxu0 0
    %719 = vmatpush2.bf16.msra.mxu0 %v499
    %720 = vmatprep.subr.bf16.mxu0 0
    %721 = vmatpush2.bf16.msra.mxu0 %v498
    %722 = vmatprep.mubr.bf16.mxu0 %v177
    %723 = vmatmul.mubr.bf16.gmra.mxu0 %v176
    %v724 = vpop.f32.mrf.mxu0
    %v725 = vadd.f32 %v685, %v724
    %v726 = vpop.f32.mrf.mxu0
    %v727 = vpop.f32.mrf.mxu0
    %v728 = vpop.f32.mrf.mxu0
    %729 = vdwg.mxu0
    %vm730 = vcmask 326656
    %731 = vst.msk [vmem:[#allocation2] sm:$0xff] %vm730, %v725
    %vm732 = vcmask 80896
    %v733 = vsel %vm732, %v725, -inf
    %734 = vmax.xlane.f32.xlu0 %v733
    %v735 = vpop.xlane.xlu0 %734
    %v736 = vsub.f32 %v725, %v735
    %v737 = vmul.f32 %v736, 1.442695
    %v738 = vpow.pop %v737
    %v739 = vsel %vm732, %v738, 0.0
    %740 = vadd.xlane.f32.xlu0 %v739
    %v741 = vpop.xlane.xlu0 %740
    %v742 = vrcp.pop %v741
    %v743 = vmul.f32 %v738, %v742
    %v744 = vsel %vm732, %v743, -inf
    %745 = vmax.xlane.f32.xlu0 %v744
    %v746 = vpop.xlane.xlu0 %745
    %v747 = vsel %vm732, %v743, 0.0
    %748 = vadd.xlane.f32.xlu0 %v747
    %v749 = vpop.xlane.xlu0 %748
    %v750 = vsub.f32 1.0, %v746
    %v751 = vsub.f32 %v749, %v746
    %v752 = vrcp.pop 9.0
    %v753 = vmul.f32 %v751, %v752
    %v754 = vsub.f32 %v750, %v753
    %v755 = vadd.f32 %v754, 1e-05
    %v756 = vlog2.pop %v755
    %v757 = vmul.f32 %v756, 0.6931472
    %v758 = vsub.f32 0.0, %v757
    %v759 = vmax.f32 %v758, 0.0
    %v760 = vrot.slane %v759, 4
    %v761 = vmax.f32 %v759, %v760
    %v762 = vrot.slane %v761, 2
    %v763 = vmax.f32 %v761, %v762
    %v764 = vrot.slane %v763, 1
    %v765 = vmax.f32 %v763, %v764
    %v766 = vsub.f32 %v759, %v765
    %v767 = vmul.f32 %v766, 1.442695
    %v768 = vpow.pop %v767
    %v769 = vrot.slane %v768, 4
    %v770 = vadd.f32 %v768, %v769
    %v771 = vrot.slane %v770, 2
    %v772 = vadd.f32 %v770, %v771
    %v773 = vrot.slane %v772, 1
    %v774 = vadd.f32 %v772, %v773
    %v775 = vrcp.pop %v774
    %v776 = vmul.f32 %v768, %v775
    %v777 = vsub.f32 8.0, 2.0
    %vm778 = vcmask 7168
    %v779 = vsel %vm778, 1.0, %v776
    %v780 = vmul.f32 %v776, 0.0
    %v781 = vmul.f32 %v780, 1.442695
    %v782 = vpow.pop %v781
    %v783 = vmul.f32 %v779, %v782
    %vm784 = vcmask 15360
    %v785 = vsel %vm784, %v783, 0.0
    %v786 = vrot.slane %v785, 4
    %v787 = vadd.f32 %v785, %v786
    %v788 = vrot.slane %v787, 2
    %v789 = vadd.f32 %v787, %v788
    %v790 = vrot.slane %v789, 1
    %v791 = vadd.f32 %v789, %v790
    %v792 = vsub.f32 %v791, %v777
    %v793 = vmax.f32 %v791, 1e-20
    %v794 = vrcp.pop %v793
    %796 = vrot.lane.b32.xlu0 %v794, 127
    %v797 = vpop.permute.xlu0 %796
    %v799 = vmul.f32 %v792, %v797
    %v800 = vadd.f32 %v799, 0.0
    %v801 = vsub.f32 0.0, %v800
    %v802 = vlaneseq
    %v803 = vshrl.u32 %v802, 7
    %v804 = vsub.s32 0, %v803
    %v805 = vrot.slane %v801, %v804
    %v806 = vmul.f32 %v805, %v776
    %v807 = vmul.f32 %v806, 1.442695
    %v808 = vpow.pop %v807
    %810 = vset.pattern.permute.xlu0 0
    %811 = vperm.xlu0 %810, %v808
    %v812 = vpop.permute.xlu0 %811
    %v814 = vmul.f32 %v779, %v812
    %v815 = vsel %vm784, %v814, 0.0
    %v816 = vrot.slane %v815, 4
    %v817 = vadd.f32 %v815, %v816
    %v818 = vrot.slane %v817, 2
    %v819 = vadd.f32 %v817, %v818
    %v820 = vrot.slane %v819, 1
    %v821 = vadd.f32 %v819, %v820
    %v822 = vsub.f32 %v821, %v777
    %v823 = vmax.f32 %v821, 1e-20
    %v824 = vrcp.pop %v823
    %826 = vrot.lane.b32.xlu0 %v824, 127
    %v827 = vpop.permute.xlu0 %826
    %v829 = vmul.f32 %v822, %v827
    %v830 = vadd.f32 %v800, %v829
    %v831 = vsub.f32 0.0, %v830
    %v832 = vlaneseq
    %v833 = vshrl.u32 %v832, 7
    %v834 = vsub.s32 0, %v833
    %v835 = vrot.slane %v831, %v834
    %v836 = vmul.f32 %v835, %v776
    %v837 = vmul.f32 %v836, 1.442695
    %v838 = vpow.pop %v837
    %840 = vset.pattern.permute.xlu0 0
    %841 = vperm.xlu0 %840, %v838
    %v842 = vpop.permute.xlu0 %841
    %v844 = vmul.f32 %v779, %v842
    %v845 = vsel %vm784, %v844, 0.0
    %v846 = vrot.slane %v845, 4
    %v847 = vadd.f32 %v845, %v846
    %v848 = vrot.slane %v847, 2
    %v849 = vadd.f32 %v847, %v848
    %v850 = vrot.slane %v849, 1
    %v851 = vadd.f32 %v849, %v850
    %v852 = vsub.f32 %v851, %v777
    %v853 = vmax.f32 %v851, 1e-20
    %v854 = vrcp.pop %v853
    %856 = vrot.lane.b32.xlu0 %v854, 127
    %v857 = vpop.permute.xlu0 %856
    %v859 = vmul.f32 %v852, %v857
    %v860 = vadd.f32 %v830, %v859
    %v861 = vsub.f32 0.0, %v860
    %v862 = vlaneseq
    %v863 = vshrl.u32 %v862, 7
    %v864 = vsub.s32 0, %v863
    %v865 = vrot.slane %v861, %v864
    %v866 = vmul.f32 %v865, %v776
    %v867 = vmul.f32 %v866, 1.442695
    %v868 = vpow.pop %v867
    %870 = vset.pattern.permute.xlu0 0
    %871 = vperm.xlu0 %870, %v868
    %v872 = vpop.permute.xlu0 %871
    %v874 = vmul.f32 %v779, %v872
    %v875 = vsel %vm784, %v874, 0.0
    %v876 = vrot.slane %v875, 4
    %v877 = vadd.f32 %v875, %v876
    %v878 = vrot.slane %v877, 2
    %v879 = vadd.f32 %v877, %v878
    %v880 = vrot.slane %v879, 1
    %v881 = vadd.f32 %v879, %v880
    %v882 = vsub.f32 %v881, %v777
    %v883 = vmax.f32 %v881, 1e-20
    %v884 = vrcp.pop %v883
    %886 = vrot.lane.b32.xlu0 %v884, 127
    %v887 = vpop.permute.xlu0 %886
    %v889 = vmul.f32 %v882, %v887
    %v890 = vadd.f32 %v860, %v889
    %v891 = vsub.f32 0.0, %v890
    %v892 = vlaneseq
    %v893 = vshrl.u32 %v892, 7
    %v894 = vsub.s32 0, %v893
    %v895 = vrot.slane %v891, %v894
    %v896 = vmul.f32 %v895, %v776
    %v897 = vmul.f32 %v896, 1.442695
    %v898 = vpow.pop %v897
    %900 = vset.pattern.permute.xlu0 0
    %901 = vperm.xlu0 %900, %v898
    %v902 = vpop.permute.xlu0 %901
    %v904 = vmul.f32 %v779, %v902
    %v905 = vsel %vm784, %v904, 0.0
    %v906 = vrot.slane %v905, 4
    %v907 = vadd.f32 %v905, %v906
    %v908 = vrot.slane %v907, 2
    %v909 = vadd.f32 %v907, %v908
    %v910 = vrot.slane %v909, 1
    %v911 = vadd.f32 %v909, %v910
    %v912 = vsub.f32 %v911, %v777
    %v913 = vmax.f32 %v911, 1e-20
    %v914 = vrcp.pop %v913
    %916 = vrot.lane.b32.xlu0 %v914, 127
    %v917 = vpop.permute.xlu0 %916
    %v919 = vmul.f32 %v912, %v917
    %v920 = vadd.f32 %v890, %v919
    %v921 = vsub.f32 0.0, %v920
    %v922 = vlaneseq
    %v923 = vshrl.u32 %v922, 7
    %v924 = vsub.s32 0, %v923
    %v925 = vrot.slane %v921, %v924
    %v926 = vmul.f32 %v925, %v776
    %v927 = vmul.f32 %v926, 1.442695
    %v928 = vpow.pop %v927
    %930 = vset.pattern.permute.xlu0 0
    %931 = vperm.xlu0 %930, %v928
    %v932 = vpop.permute.xlu0 %931
    %v934 = vmul.f32 %v779, %v932
    %v935 = vsel %vm784, %v934, 0.0
    %v936 = vrot.slane %v935, 4
    %v937 = vadd.f32 %v935, %v936
    %v938 = vrot.slane %v937, 2
    %v939 = vadd.f32 %v937, %v938
    %v940 = vrot.slane %v939, 1
    %v941 = vadd.f32 %v939, %v940
    %v942 = vsub.f32 %v941, %v777
    %v943 = vmax.f32 %v941, 1e-20
    %v944 = vrcp.pop %v943
    %946 = vrot.lane.b32.xlu0 %v944, 127
    %v947 = vpop.permute.xlu0 %946
    %v949 = vmul.f32 %v942, %v947
    %v950 = vadd.f32 %v920, %v949
    %v951 = vsub.f32 0.0, %v950
    %v952 = vlaneseq
    %v953 = vshrl.u32 %v952, 7
    %v954 = vsub.s32 0, %v953
    %v955 = vrot.slane %v951, %v954
    %v956 = vmul.f32 %v955, %v776
    %v957 = vmul.f32 %v956, 1.442695
    %v958 = vpow.pop %v957
    %v959 = vsub.f32 1.0, %v958
    %vm960 = vcmask 162896
    %v961 = vsel %vm960, %v725, -inf
    %962 = vmax.xlane.f32.xlu0 %v961
    %v963 = vpop.xlane.xlu0 %962
    %v964 = vsub.f32 %v725, %v963
    %v965 = vmul.f32 %v964, 1.442695
    %v966 = vpow.pop %v965
    %968 = vrot.lane.b32.xlu0 %v966, 118
    %v969 = vpop.permute.xlu0 %968
    %v971 = vsel %vm732, %v969, 0.0
    %972 = vadd.xlane.f32.xlu0 %v971
    %v973 = vpop.xlane.xlu0 %972
    %v974 = vrcp.pop %v973
    %v975 = vmul.f32 %v966, %v974
    %v976 = vsel %vm960, %v975, -inf
    %977 = vmax.xlane.f32.xlu0 %v976
    %v978 = vpop.xlane.xlu0 %977
    %980 = vrot.lane.b32.xlu0 %v975, 118
    %v981 = vpop.permute.xlu0 %980
    %v983 = vsel %vm732, %v981, 0.0
    %984 = vadd.xlane.f32.xlu0 %v983
    %v985 = vpop.xlane.xlu0 %984
    %v986 = vsub.f32 1.0, %v978
    %v987 = vsub.f32 %v985, %v978
    %v988 = vmul.f32 %v987, %v752
    %v989 = vsub.f32 %v986, %v988
    %v990 = vadd.f32 %v989, 1e-05
    %v991 = vlog2.pop %v990
    %v992 = vmul.f32 %v991, 0.6931472
    %v993 = vsub.f32 0.0, %v992
    %v994 = vmax.f32 %v993, 0.0
    %v995 = vrot.slane %v994, 4
    %v996 = vmax.f32 %v994, %v995
    %v997 = vrot.slane %v996, 2
    %v998 = vmax.f32 %v996, %v997
    %v999 = vrot.slane %v998, 1
    %v1000 = vmax.f32 %v998, %v999
    %v1001 = vsub.f32 %v994, %v1000
    %v1002 = vmul.f32 %v1001, 1.442695
    %v1003 = vpow.pop %v1002
    %v1004 = vrot.slane %v1003, 4
    %v1005 = vadd.f32 %v1003, %v1004
    %v1006 = vrot.slane %v1005, 2
    %v1007 = vadd.f32 %v1005, %v1006
    %v1008 = vrot.slane %v1007, 1
    %v1009 = vadd.f32 %v1007, %v1008
    %v1010 = vrcp.pop %v1009
    %v1011 = vmul.f32 %v1003, %v1010
    %v1012 = vsel %vm778, %v958, 0.0
    %v1013 = vrot.slane %v1012, 4
    %v1014 = vadd.f32 %v1012, %v1013
    %v1015 = vrot.slane %v1014, 2
    %v1016 = vadd.f32 %v1014, %v1015
    %v1017 = vrot.slane %v1016, 1
    %v1018 = vadd.f32 %v1016, %v1017
    %v1019 = vsub.f32 %v1018, 2.0
    %v1020 = vsel %vm778, 1.0, %v1011
    %1022 = vset.pattern.permute.xlu0 0
    %1023 = vperm.xlu0 %1022, %v958
    %v1024 = vpop.permute.xlu0 %1023
    %v1026 = vmul.f32 %v1024, %v1020
    %v1027 = vmul.f32 %v1011, 0.0
    %v1028 = vmul.f32 %v1027, 1.442695
    %v1029 = vpow.pop %v1028
    %v1030 = vmul.f32 %v1026, %v1029
    %v1031 = vsel %vm784, %v1030, 0.0
    %v1032 = vrot.slane %v1031, 4
    %v1033 = vadd.f32 %v1031, %v1032
    %v1034 = vrot.slane %v1033, 2
    %v1035 = vadd.f32 %v1033, %v1034
    %v1036 = vrot.slane %v1035, 1
    %v1037 = vadd.f32 %v1035, %v1036
    %v1038 = vsub.f32 %v1037, %v1019
    %v1039 = vmax.f32 %v1037, 1e-20
    %v1040 = vrcp.pop %v1039
    %1042 = vrot.lane.b32.xlu0 %v1040, 127
    %v1043 = vpop.permute.xlu0 %1042
    %v1045 = vmul.f32 %v1038, %v1043
    %v1046 = vadd.f32 %v1045, 0.0
    %v1047 = vsub.f32 0.0, %v1046
    %v1048 = vlaneseq
    %v1049 = vshrl.u32 %v1048, 7
    %v1050 = vsub.s32 0, %v1049
    %v1051 = vrot.slane %v1047, %v1050
    %v1052 = vmul.f32 %v1051, %v1011
    %v1053 = vmul.f32 %v1052, 1.442695
    %v1054 = vpow.pop %v1053
    %1056 = vset.pattern.permute.xlu0 0
    %1057 = vperm.xlu0 %1056, %v1054
    %v1058 = vpop.permute.xlu0 %1057
    %v1060 = vmul.f32 %v1026, %v1058
    %v1061 = vsel %vm784, %v1060, 0.0
    %v1062 = vrot.slane %v1061, 4
    %v1063 = vadd.f32 %v1061, %v1062
    %v1064 = vrot.slane %v1063, 2
    %v1065 = vadd.f32 %v1063, %v1064
    %v1066 = vrot.slane %v1065, 1
    %v1067 = vadd.f32 %v1065, %v1066
    %v1068 = vsub.f32 %v1067, %v1019
    %v1069 = vmax.f32 %v1067, 1e-20
    %v1070 = vrcp.pop %v1069
    %1072 = vrot.lane.b32.xlu0 %v1070, 127
    %v1073 = vpop.permute.xlu0 %1072
    %v1075 = vmul.f32 %v1068, %v1073
    %v1076 = vadd.f32 %v1046, %v1075
    %v1077 = vsub.f32 0.0, %v1076
    %v1078 = vlaneseq
    %v1079 = vshrl.u32 %v1078, 7
    %v1080 = vsub.s32 0, %v1079
    %v1081 = vrot.slane %v1077, %v1080
    %v1082 = vmul.f32 %v1081, %v1011
    %v1083 = vmul.f32 %v1082, 1.442695
    %v1084 = vpow.pop %v1083
    %1086 = vset.pattern.permute.xlu0 0
    %1087 = vperm.xlu0 %1086, %v1084
    %v1088 = vpop.permute.xlu0 %1087
    %v1090 = vmul.f32 %v1026, %v1088
    %v1091 = vsel %vm784, %v1090, 0.0
    %v1092 = vrot.slane %v1091, 4
    %v1093 = vadd.f32 %v1091, %v1092
    %v1094 = vrot.slane %v1093, 2
    %v1095 = vadd.f32 %v1093, %v1094
    %v1096 = vrot.slane %v1095, 1
    %v1097 = vadd.f32 %v1095, %v1096
    %v1098 = vsub.f32 %v1097, %v1019
    %v1099 = vmax.f32 %v1097, 1e-20
    %v1100 = vrcp.pop %v1099
    %1102 = vrot.lane.b32.xlu0 %v1100, 127
    %v1103 = vpop.permute.xlu0 %1102
    %v1105 = vmul.f32 %v1098, %v1103
    %v1106 = vadd.f32 %v1076, %v1105
    %v1107 = vsub.f32 0.0, %v1106
    %v1108 = vlaneseq
    %v1109 = vshrl.u32 %v1108, 7
    %v1110 = vsub.s32 0, %v1109
    %v1111 = vrot.slane %v1107, %v1110
    %v1112 = vmul.f32 %v1111, %v1011
    %v1113 = vmul.f32 %v1112, 1.442695
    %v1114 = vpow.pop %v1113
    %1116 = vset.pattern.permute.xlu0 0
    %1117 = vperm.xlu0 %1116, %v1114
    %v1118 = vpop.permute.xlu0 %1117
    %v1120 = vmul.f32 %v1026, %v1118
    %v1121 = vsel %vm784, %v1120, 0.0
    %v1122 = vrot.slane %v1121, 4
    %v1123 = vadd.f32 %v1121, %v1122
    %v1124 = vrot.slane %v1123, 2
    %v1125 = vadd.f32 %v1123, %v1124
    %v1126 = vrot.slane %v1125, 1
    %v1127 = vadd.f32 %v1125, %v1126
    %v1128 = vsub.f32 %v1127, %v1019
    %v1129 = vmax.f32 %v1127, 1e-20
    %v1130 = vrcp.pop %v1129
    %1132 = vrot.lane.b32.xlu0 %v1130, 127
    %v1133 = vpop.permute.xlu0 %1132
    %v1135 = vmul.f32 %v1128, %v1133
    %v1136 = vadd.f32 %v1106, %v1135
    %v1137 = vsub.f32 0.0, %v1136
    %v1138 = vlaneseq
    %v1139 = vshrl.u32 %v1138, 7
    %v1140 = vsub.s32 0, %v1139
    %v1141 = vrot.slane %v1137, %v1140
    %v1142 = vmul.f32 %v1141, %v1011
    %v1143 = vmul.f32 %v1142, 1.442695
    %v1144 = vpow.pop %v1143
    %1146 = vset.pattern.permute.xlu0 0
    %1147 = vperm.xlu0 %1146, %v1144
    %v1148 = vpop.permute.xlu0 %1147
    %v1150 = vmul.f32 %v1026, %v1148
    %v1151 = vsel %vm784, %v1150, 0.0
    %v1152 = vrot.slane %v1151, 4
    %v1153 = vadd.f32 %v1151, %v1152
    %v1154 = vrot.slane %v1153, 2
    %v1155 = vadd.f32 %v1153, %v1154
    %v1156 = vrot.slane %v1155, 1
    %v1157 = vadd.f32 %v1155, %v1156
    %v1158 = vsub.f32 %v1157, %v1019
    %v1159 = vmax.f32 %v1157, 1e-20
    %v1160 = vrcp.pop %v1159
    %1162 = vrot.lane.b32.xlu0 %v1160, 127
    %v1163 = vpop.permute.xlu0 %1162
    %v1165 = vmul.f32 %v1158, %v1163
    %v1166 = vadd.f32 %v1136, %v1165
    %v1167 = vsub.f32 0.0, %v1166
    %v1168 = vlaneseq
    %v1169 = vshrl.u32 %v1168, 7
    %v1170 = vsub.s32 0, %v1169
    %v1171 = vrot.slane %v1167, %v1170
    %v1172 = vmul.f32 %v1171, %v1011
    %v1173 = vmul.f32 %v1172, 1.442695
    %v1174 = vpow.pop %v1173
    %1176 = vset.pattern.permute.xlu0 0
    %1177 = vperm.xlu0 %1176, %v1174
    %v1178 = vpop.permute.xlu0 %1177
    %v1180 = vmul.f32 %v1026, %v1178
    %v1181 = vsel %vm784, %v1180, 0.0
    %v1182 = vrot.slane %v1181, 4
    %v1183 = vadd.f32 %v1181, %v1182
    %v1184 = vrot.slane %v1183, 2
    %v1185 = vadd.f32 %v1183, %v1184
    %v1186 = vrot.slane %v1185, 1
    %v1187 = vadd.f32 %v1185, %v1186
    %v1188 = vsub.f32 %v1187, %v1019
    %v1189 = vmax.f32 %v1187, 1e-20
    %v1190 = vrcp.pop %v1189
    %1192 = vrot.lane.b32.xlu0 %v1190, 127
    %v1193 = vpop.permute.xlu0 %1192
    %v1195 = vmul.f32 %v1188, %v1193
    %v1196 = vadd.f32 %v1166, %v1195
    %v1197 = vsub.f32 0.0, %v1196
    %v1198 = vlaneseq
    %v1199 = vshrl.u32 %v1198, 7
    %v1200 = vsub.s32 0, %v1199
    %v1201 = vrot.slane %v1197, %v1200
    %v1202 = vmul.f32 %v1201, %v1011
    %v1203 = vmul.f32 %v1202, 1.442695
    %v1204 = vpow.pop %v1203
    %v1205 = vmul.f32 %v958, %v1204
    %v1206 = vsub.f32 %v958, %v1205
    %vm1207 = vcmask 244896
    %v1208 = vsel %vm1207, %v725, -inf
    %1209 = vmax.xlane.f32.xlu0 %v1208
    %v1210 = vpop.xlane.xlu0 %1209
    %v1211 = vsub.f32 %v725, %v1210
    %v1212 = vmul.f32 %v1211, 1.442695
    %v1213 = vpow.pop %v1212
    %1215 = vrot.lane.b32.xlu0 %v1213, 108
    %v1216 = vpop.permute.xlu0 %1215
    %v1218 = vsel %vm732, %v1216, 0.0
    %1219 = vadd.xlane.f32.xlu0 %v1218
    %v1220 = vpop.xlane.xlu0 %1219
    %v1221 = vrcp.pop %v1220
    %v1222 = vmul.f32 %v1213, %v1221
    %v1223 = vsel %vm1207, %v1222, -inf
    %1224 = vmax.xlane.f32.xlu0 %v1223
    %v1225 = vpop.xlane.xlu0 %1224
    %1227 = vrot.lane.b32.xlu0 %v1222, 108
    %v1228 = vpop.permute.xlu0 %1227
    %v1230 = vsel %vm732, %v1228, 0.0
    %1231 = vadd.xlane.f32.xlu0 %v1230
    %v1232 = vpop.xlane.xlu0 %1231
    %v1233 = vsub.f32 1.0, %v1225
    %v1234 = vsub.f32 %v1232, %v1225
    %v1235 = vmul.f32 %v1234, %v752
    %v1236 = vsub.f32 %v1233, %v1235
    %v1237 = vadd.f32 %v1236, 1e-05
    %v1238 = vlog2.pop %v1237
    %v1239 = vmul.f32 %v1238, 0.6931472
    %v1240 = vsub.f32 0.0, %v1239
    %v1241 = vmax.f32 %v1240, 0.0
    %v1242 = vrot.slane %v1241, 4
    %v1243 = vmax.f32 %v1241, %v1242
    %v1244 = vrot.slane %v1243, 2
    %v1245 = vmax.f32 %v1243, %v1244
    %v1246 = vrot.slane %v1245, 1
    %v1247 = vmax.f32 %v1245, %v1246
    %v1248 = vsub.f32 %v1241, %v1247
    %v1249 = vmul.f32 %v1248, 1.442695
    %v1250 = vpow.pop %v1249
    %v1251 = vrot.slane %v1250, 4
    %v1252 = vadd.f32 %v1250, %v1251
    %v1253 = vrot.slane %v1252, 2
    %v1254 = vadd.f32 %v1252, %v1253
    %v1255 = vrot.slane %v1254, 1
    %v1256 = vadd.f32 %v1254, %v1255
    %v1257 = vrcp.pop %v1256
    %v1258 = vmul.f32 %v1250, %v1257
    %v1259 = vsel %vm778, %v1205, 0.0
    %v1260 = vrot.slane %v1259, 4
    %v1261 = vadd.f32 %v1259, %v1260
    %v1262 = vrot.slane %v1261, 2
    %v1263 = vadd.f32 %v1261, %v1262
    %v1264 = vrot.slane %v1263, 1
    %v1265 = vadd.f32 %v1263, %v1264
    %v1266 = vsub.f32 %v1265, 2.0
    %v1267 = vsel %vm778, 1.0, %v1258
    %1269 = vset.pattern.permute.xlu0 0
    %1270 = vperm.xlu0 %1269, %v1205
    %v1271 = vpop.permute.xlu0 %1270
    %v1273 = vmul.f32 %v1271, %v1267
    %v1274 = vmul.f32 %v1258, 0.0
    %v1275 = vmul.f32 %v1274, 1.442695
    %v1276 = vpow.pop %v1275
    %v1277 = vmul.f32 %v1273, %v1276
    %v1278 = vsel %vm784, %v1277, 0.0
    %v1279 = vrot.slane %v1278, 4
    %v1280 = vadd.f32 %v1278, %v1279
    %v1281 = vrot.slane %v1280, 2
    %v1282 = vadd.f32 %v1280, %v1281
    %v1283 = vrot.slane %v1282, 1
    %v1284 = vadd.f32 %v1282, %v1283
    %v1285 = vsub.f32 %v1284, %v1266
    %v1286 = vmax.f32 %v1284, 1e-20
    %v1287 = vrcp.pop %v1286
    %1289 = vrot.lane.b32.xlu0 %v1287, 127
    %v1290 = vpop.permute.xlu0 %1289
    %v1292 = vmul.f32 %v1285, %v1290
    %v1293 = vadd.f32 %v1292, 0.0
    %v1294 = vsub.f32 0.0, %v1293
    %v1295 = vlaneseq
    %v1296 = vshrl.u32 %v1295, 7
    %v1297 = vsub.s32 0, %v1296
    %v1298 = vrot.slane %v1294, %v1297
    %v1299 = vmul.f32 %v1298, %v1258
    %v1300 = vmul.f32 %v1299, 1.442695
    %v1301 = vpow.pop %v1300
    %1303 = vset.pattern.permute.xlu0 0
    %1304 = vperm.xlu0 %1303, %v1301
    %v1305 = vpop.permute.xlu0 %1304
    %v1307 = vmul.f32 %v1273, %v1305
    %v1308 = vsel %vm784, %v1307, 0.0
    %v1309 = vrot.slane %v1308, 4
    %v1310 = vadd.f32 %v1308, %v1309
    %v1311 = vrot.slane %v1310, 2
    %v1312 = vadd.f32 %v1310, %v1311
    %v1313 = vrot.slane %v1312, 1
    %v1314 = vadd.f32 %v1312, %v1313
    %v1315 = vsub.f32 %v1314, %v1266
    %v1316 = vmax.f32 %v1314, 1e-20
    %v1317 = vrcp.pop %v1316
    %1319 = vrot.lane.b32.xlu0 %v1317, 127
    %v1320 = vpop.permute.xlu0 %1319
    %v1322 = vmul.f32 %v1315, %v1320
    %v1323 = vadd.f32 %v1293, %v1322
    %v1324 = vsub.f32 0.0, %v1323
    %v1325 = vlaneseq
    %v1326 = vshrl.u32 %v1325, 7
    %v1327 = vsub.s32 0, %v1326
    %v1328 = vrot.slane %v1324, %v1327
    %v1329 = vmul.f32 %v1328, %v1258
    %v1330 = vmul.f32 %v1329, 1.442695
    %v1331 = vpow.pop %v1330
    %1333 = vset.pattern.permute.xlu0 0
    %1334 = vperm.xlu0 %1333, %v1331
    %v1335 = vpop.permute.xlu0 %1334
    %v1337 = vmul.f32 %v1273, %v1335
    %v1338 = vsel %vm784, %v1337, 0.0
    %v1339 = vrot.slane %v1338, 4
    %v1340 = vadd.f32 %v1338, %v1339
    %v1341 = vrot.slane %v1340, 2
    %v1342 = vadd.f32 %v1340, %v1341
    %v1343 = vrot.slane %v1342, 1
    %v1344 = vadd.f32 %v1342, %v1343
    %v1345 = vsub.f32 %v1344, %v1266
    %v1346 = vmax.f32 %v1344, 1e-20
    %v1347 = vrcp.pop %v1346
    %1349 = vrot.lane.b32.xlu0 %v1347, 127
    %v1350 = vpop.permute.xlu0 %1349
    %v1352 = vmul.f32 %v1345, %v1350
    %v1353 = vadd.f32 %v1323, %v1352
    %v1354 = vsub.f32 0.0, %v1353
    %v1355 = vlaneseq
    %v1356 = vshrl.u32 %v1355, 7
    %v1357 = vsub.s32 0, %v1356
    %v1358 = vrot.slane %v1354, %v1357
    %v1359 = vmul.f32 %v1358, %v1258
    %v1360 = vmul.f32 %v1359, 1.442695
    %v1361 = vpow.pop %v1360
    %1363 = vset.pattern.permute.xlu0 0
    %1364 = vperm.xlu0 %1363, %v1361
    %v1365 = vpop.permute.xlu0 %1364
    %v1367 = vmul.f32 %v1273, %v1365
    %v1368 = vsel %vm784, %v1367, 0.0
    %v1369 = vrot.slane %v1368, 4
    %v1370 = vadd.f32 %v1368, %v1369
    %v1371 = vrot.slane %v1370, 2
    %v1372 = vadd.f32 %v1370, %v1371
    %v1373 = vrot.slane %v1372, 1
    %v1374 = vadd.f32 %v1372, %v1373
    %v1375 = vsub.f32 %v1374, %v1266
    %v1376 = vmax.f32 %v1374, 1e-20
    %v1377 = vrcp.pop %v1376
    %1379 = vrot.lane.b32.xlu0 %v1377, 127
    %v1380 = vpop.permute.xlu0 %1379
    %v1382 = vmul.f32 %v1375, %v1380
    %v1383 = vadd.f32 %v1353, %v1382
    %v1384 = vsub.f32 0.0, %v1383
    %v1385 = vlaneseq
    %v1386 = vshrl.u32 %v1385, 7
    %v1387 = vsub.s32 0, %v1386
    %v1388 = vrot.slane %v1384, %v1387
    %v1389 = vmul.f32 %v1388, %v1258
    %v1390 = vmul.f32 %v1389, 1.442695
    %v1391 = vpow.pop %v1390
    %1393 = vset.pattern.permute.xlu0 0
    %1394 = vperm.xlu0 %1393, %v1391
    %v1395 = vpop.permute.xlu0 %1394
    %v1397 = vmul.f32 %v1273, %v1395
    %v1398 = vsel %vm784, %v1397, 0.0
    %v1399 = vrot.slane %v1398, 4
    %v1400 = vadd.f32 %v1398, %v1399
    %v1401 = vrot.slane %v1400, 2
    %v1402 = vadd.f32 %v1400, %v1401
    %v1403 = vrot.slane %v1402, 1
    %v1404 = vadd.f32 %v1402, %v1403
    %v1405 = vsub.f32 %v1404, %v1266
    %v1406 = vmax.f32 %v1404, 1e-20
    %v1407 = vrcp.pop %v1406
    %1409 = vrot.lane.b32.xlu0 %v1407, 127
    %v1410 = vpop.permute.xlu0 %1409
    %v1412 = vmul.f32 %v1405, %v1410
    %v1413 = vadd.f32 %v1383, %v1412
    %v1414 = vsub.f32 0.0, %v1413
    %v1415 = vlaneseq
    %v1416 = vshrl.u32 %v1415, 7
    %v1417 = vsub.s32 0, %v1416
    %v1418 = vrot.slane %v1414, %v1417
    %v1419 = vmul.f32 %v1418, %v1258
    %v1420 = vmul.f32 %v1419, 1.442695
    %v1421 = vpow.pop %v1420
    %1423 = vset.pattern.permute.xlu0 0
    %1424 = vperm.xlu0 %1423, %v1421
    %v1425 = vpop.permute.xlu0 %1424
    %v1427 = vmul.f32 %v1273, %v1425
    %v1428 = vsel %vm784, %v1427, 0.0
    %v1429 = vrot.slane %v1428, 4
    %v1430 = vadd.f32 %v1428, %v1429
    %v1431 = vrot.slane %v1430, 2
    %v1432 = vadd.f32 %v1430, %v1431
    %v1433 = vrot.slane %v1432, 1
    %v1434 = vadd.f32 %v1432, %v1433
    %v1435 = vsub.f32 %v1434, %v1266
    %v1436 = vmax.f32 %v1434, 1e-20
    %v1437 = vrcp.pop %v1436
    %1439 = vrot.lane.b32.xlu0 %v1437, 127
    %v1440 = vpop.permute.xlu0 %1439
    %v1442 = vmul.f32 %v1435, %v1440
    %v1443 = vadd.f32 %v1413, %v1442
    %v1444 = vsub.f32 0.0, %v1443
    %v1445 = vlaneseq
    %v1446 = vshrl.u32 %v1445, 7
    %v1447 = vsub.s32 0, %v1446
    %v1448 = vrot.slane %v1444, %v1447
    %v1449 = vmul.f32 %v1448, %v1258
    %v1450 = vmul.f32 %v1449, 1.442695
    %v1451 = vpow.pop %v1450
    %v1452 = vmul.f32 %v1205, %v1451
    %v1453 = vsub.f32 %v1205, %v1452
    %vm1454 = vcmask 326896
    %v1455 = vsel %vm1454, %v725, -inf
    %1456 = vmax.xlane.f32.xlu0 %v1455
    %v1457 = vpop.xlane.xlu0 %1456
    %v1458 = vsub.f32 %v725, %v1457
    %v1459 = vmul.f32 %v1458, 1.442695
    %v1460 = vpow.pop %v1459
    %1462 = vrot.lane.b32.xlu0 %v1460, 98
    %v1463 = vpop.permute.xlu0 %1462
    %v1465 = vsel %vm732, %v1463, 0.0
    %1466 = vadd.xlane.f32.xlu0 %v1465
    %v1467 = vpop.xlane.xlu0 %1466
    %v1468 = vrcp.pop %v1467
    %v1469 = vmul.f32 %v1460, %v1468
    %v1470 = vsel %vm1454, %v1469, -inf
    %1471 = vmax.xlane.f32.xlu0 %v1470
    %v1472 = vpop.xlane.xlu0 %1471
    %1474 = vrot.lane.b32.xlu0 %v1469, 98
    %v1475 = vpop.permute.xlu0 %1474
    %v1477 = vsel %vm732, %v1475, 0.0
    %1478 = vadd.xlane.f32.xlu0 %v1477
    %v1479 = vpop.xlane.xlu0 %1478
    %v1480 = vsub.f32 1.0, %v1472
    %v1481 = vsub.f32 %v1479, %v1472
    %v1482 = vmul.f32 %v1481, %v752
    %v1483 = vsub.f32 %v1480, %v1482
    %v1484 = vadd.f32 %v1483, 1e-05
    %v1485 = vlog2.pop %v1484
    %v1486 = vmul.f32 %v1485, 0.6931472
    %v1487 = vsub.f32 0.0, %v1486
    %v1488 = vmax.f32 %v1487, 0.0
    %v1489 = vrot.slane %v1488, 4
    %v1490 = vmax.f32 %v1488, %v1489
    %v1491 = vrot.slane %v1490, 2
    %v1492 = vmax.f32 %v1490, %v1491
    %v1493 = vrot.slane %v1492, 1
    %v1494 = vmax.f32 %v1492, %v1493
    %v1495 = vsub.f32 %v1488, %v1494
    %v1496 = vmul.f32 %v1495, 1.442695
    %v1497 = vpow.pop %v1496
    %v1498 = vrot.slane %v1497, 4
    %v1499 = vadd.f32 %v1497, %v1498
    %v1500 = vrot.slane %v1499, 2
    %v1501 = vadd.f32 %v1499, %v1500
    %v1502 = vrot.slane %v1501, 1
    %v1503 = vadd.f32 %v1501, %v1502
    %v1504 = vrcp.pop %v1503
    %v1505 = vmul.f32 %v1497, %v1504
    %1507 = vrot.lane.b32.xlu0 %v1206, 1
    %v1508 = vpop.permute.xlu0 %1507
    %1511 = vrot.lane.b32.xlu0 %v1453, 2
    %v1512 = vpop.permute.xlu0 %1511
    %1515 = vrot.lane.b32.xlu0 %v1452, 3
    %v1516 = vpop.permute.xlu0 %1515
    %v1518 = vsel %vm778, %v959, %v1508
    %v1519 = vsel %vm784, %v1518, %v1512
    %vm1520 = vcmask 23552
    %v1521 = vsel %vm1520, %v1519, %v1516
    %vm1522 = vcmask 31744
    %1523 = vst.msk [vmem:[%s4] sm:$0xff] %vm1522, %v1521
    %v1524 = vsel %vm778, %v776, %v1011
    %v1525 = vsel %vm784, %v1524, %v1258
    %v1526 = vsel %vm1520, %v1525, %v1505
    %1527 = vst.msk [vmem:[%s5] sm:$0xff] %vm1522, %v1526
    // Predicated region
    $region14: #{tpu_custom_call.1} parent=1 // pred_check
      _
    $region15: #{tpu_custom_call.1} parent=1 // pred_check_branch
      %1529 = sbr.rel (0) target = $region17
    $region16: #{tpu_custom_call.1} parent=1 // pred_region
      %s1531 = ssub.s32 128, 128
      %1532 = vsyncadd [#allocation3], %s1531
      %s1534 = sshll.u32 [#allocation2], 4
      %s1535 = int_to_ptr.vmem [resolvable:$true] %s1534
      %1537 = dma.vmem_to_hbm [thread:$0]  %s1535, 128, %s3, [#allocation3]
    $region17: #{tpu_custom_call.1} parent=1 // pred_fallthru
      _
    // Predicated region
    $region18: #{tpu_custom_call.1} parent=1 // pred_check
      _
    $region19: #{tpu_custom_call.1} parent=1 // pred_check_branch
      %1539 = sbr.rel (0) target = $region21
    $region20: #{tpu_custom_call.1} parent=1 // pred_region
      _
    $region21: #{tpu_custom_call.1} parent=1 // pred_fallthru
      _
    // Predicated region
    $region22: #{tpu_custom_call.1} parent=1 // pred_check
      _
    $region23: #{tpu_custom_call.1} parent=1 // pred_check_branch
      %1541 = sbr.rel (0) target = $region25
    $region24: #{tpu_custom_call.1} parent=1 // pred_region
      _
    $region25: #{tpu_custom_call.1} parent=1 // pred_fallthru
      _
    // Predicated region
    $region26: #{tpu_custom_call.1} parent=1 // pred_check
      _
    $region27: #{tpu_custom_call.1} parent=1 // pred_check_branch
      %1543 = sbr.rel (0) target = $region29
    $region28: #{tpu_custom_call.1} parent=1 // pred_region
      %1544 = dma.done [#allocation3], 128
    $region29: #{tpu_custom_call.1} parent=1 // pred_fallthru
      _
    // Predicated region
    $region30: #{tpu_custom_call.1} parent=1 // pred_check
      _
    $region31: #{tpu_custom_call.1} parent=1 // pred_check_branch
      %1546 = sbr.rel (0) target = $region33
    $region32: #{tpu_custom_call.1} parent=1 // pred_region
      _
    $region33: #{tpu_custom_call.1} parent=1 // pred_fallthru
      _
    // Predicated region
    $region34: #{tpu_custom_call.1} parent=1 // pred_check
      _
    $region35: #{tpu_custom_call.1} parent=1 // pred_check_branch
      %1548 = sbr.rel (0) target = $region37
    $region36: #{tpu_custom_call.1} parent=1 // pred_region
      _
    $region37: #{tpu_custom_call.1} parent=1 // pred_fallthru
      _
    %1549 = vsyncpa [#allocation3], 1

</llo_original>
